<compile_context>
chip_gen: v6e
topology: v6e:2x2x1
jax: 0.10.0
libtpu: 0.0.40
codegen_flags: <defaults>
</compile_context>

<pallas_src>
import functools

import jax
import jax.numpy as jnp
import numpy as np
from jax.experimental import pallas as pl
from jax.experimental.pallas import tpu as pltpu

_MiB = 1024 * 1024


def _round_up(x, m):
    return (x + m - 1) // m * m


def _vmem_capacity_bytes():
    """Physical VMEM per TensorCore; conservative fallback if query fails."""
    try:
        cap = int(pltpu.get_tpu_info().vmem_capacity_bytes)
        if cap > 0:
            return cap
    except Exception:
        pass
    return 64 * _MiB  # v7x per-core figure (smallest of current generations)


def _vq_kernel(n_valid, tile_n, x_ref, cbsq_ref, neg2cbt_ref, cb_ref, q_ref, sse_ref):
    # x_ref:       (TN, D) tile of flattened latents
    # cbsq_ref:    (1, K)  precomputed ||e_k||^2                    (resident)
    # neg2cbt_ref: (D, K)  precomputed -2 * codebook^T              (resident)
    # cb_ref:      (K, D)  codebook                                 (resident)
    # q_ref:       (TN, D) quantized output tile
    # sse_ref:     (1, 1, 128) per-tile partial SSE (scalar broadcast over lanes)
    i = pl.program_id(0)

    x = x_ref[...].astype(jnp.float32)                         # (TN, D)
    cb = cb_ref[...].astype(jnp.float32)                       # (K, D)
    tn = x.shape[0]
    k = cb.shape[0]

    # dist[n, j] = ||e_j||^2 - 2 x_n . e_j   (||x_n||^2 dropped: constant per
    # row, does not change the argmin). The -2 is folded into neg2cbt.
    dist = (
        jnp.dot(
            x_ref[...].astype(neg2cbt_ref.dtype),
            neg2cbt_ref[...],
            preferred_element_type=jnp.float32,
        )
        + cbsq_ref[...].astype(jnp.float32)
    )                                                          # (TN, K)

    # argmin along K with first-index tie-breaking (matches torch.argmin).
    min_d = jnp.min(dist, axis=-1, keepdims=True)              # (TN, 1)
    iota_k = jax.lax.broadcasted_iota(jnp.int32, (tn, k), 1)   # (TN, K)
    idx = jnp.min(jnp.where(dist == min_d, iota_k, k), axis=-1, keepdims=True)

    # Gather codebook rows via one-hot matmul (MXU-friendly gather).
    onehot = (iota_k == idx).astype(jnp.float32)               # (TN, K)
    q = jnp.dot(onehot, cb, preferred_element_type=jnp.float32)  # (TN, D)
    q_ref[...] = q.astype(q_ref.dtype)
    # TODO(synk): for D < 128 the q writeback is a lane-sparse masked store; a
    # lane-dense (N*D/128, 128) output layout would speed the store path but
    # needs an in-kernel relayout -- measure before committing.

    diff = q - x

    def _store_sse(d):
        sse_ref[...] = jnp.full(sse_ref.shape, jnp.sum(d * d), dtype=jnp.float32)

    if n_valid % tile_n == 0:
        # No padded rows exist anywhere: no masking needed (static branch).
        _store_sse(diff)
    else:
        last = pl.num_programs(0) - 1

        @pl.when(i != last)
        def _():
            _store_sse(diff)

        @pl.when(i == last)
        def _():
            row = i * tile_n + jax.lax.broadcasted_iota(jnp.int32, (tn, 1), 0)
            _store_sse(jnp.where(row < n_valid, diff, 0.0))


def vector_quantize(latents, codebook, beta=0.25, tile_n=None, distance_dtype=None):
    """Pallas forward of VectorQuantizer (channel-last latents).

    Returns (quantized, vq_loss) with the straight-through forward value.
    distance_dtype: optional lower-precision dtype (e.g. jnp.bfloat16) for the
      distance matmul only; faster MXU path but argmin may flip on near-ties.
    """
    K, D = codebook.shape
    orig_shape = latents.shape
    assert orig_shape[-1] == D, "latents must be channel-last with last dim == D"
    flat = latents.reshape(-1, D)
    N = flat.shape[0]

    itemsize = np.dtype(latents.dtype).itemsize
    granule = 16 if itemsize < 4 else 8          # sublane packing granularity

    # ---- VMEM budgeting: derive tile_n from K/D and the chip's VMEM. ----
    phys_vmem = _vmem_capacity_bytes()
    budget = max(32 * _MiB, min(int(phys_vmem * 0.70), 100 * _MiB))
    dist_itemsize = 4 if distance_dtype is None else np.dtype(distance_dtype).itemsize
    # resident codebook (single-buffered): cb (f32) + (-2 cb^T) + ||e||^2
    resident_bytes = K * D * 4 + K * D * dist_itemsize + 2 * K * 4
    # per tile row: x & q HBM tiles (double-buffered) + f32 upcasts + ~4
    # (tile, K) f32 intermediates (dist, iota, onehot, compare temp).
    per_row = 2 * 2 * D * itemsize + 2 * D * 4 + 4 * K * 4
    tn_cap = max((budget - resident_bytes) // per_row, granule)

    max_tile = 8192                              # HBM roofline reached well below
    requested = max_tile if tile_n is None else tile_n
    # Keep >= 2 grid tiles whenever N allows it (lets v7x use both TensorCores).
    two_tile_cap = _round_up(max((N + 1) // 2, granule), granule)
    tn = min(requested, tn_cap, two_tile_cap, max_tile)
    tn = max(granule, (tn // granule) * granule)

    n_pad = _round_up(N, tn)
    if n_pad != N:
        flat = jnp.pad(flat, ((0, n_pad - N), (0, 0)))
    num_tiles = n_pad // tn

    cb_f32 = codebook.astype(jnp.float32)
    cb_sq = jnp.sum(cb_f32 * cb_f32, axis=-1)[None, :]         # (1, K) hoisted norms
    neg2cbt = -2.0 * cb_f32.T                                  # (D, K), -2 folded in
    if distance_dtype is not None:
        neg2cbt = neg2cbt.astype(distance_dtype)

    kernel = functools.partial(_vq_kernel, N, tn)

    def _build(single_buffer_codebook):
        def resident_spec(shape):
            idx_map = lambda i: (0,) * len(shape)
            if single_buffer_codebook:
                # Constant index_map -> never re-DMA'd; one VMEM buffer suffices.
                return pl.BlockSpec(shape, idx_map, pipeline_mode=pl.Buffered(1))
            return pl.BlockSpec(shape, idx_map)

        return pl.pallas_call(
            kernel,
            out_shape=(
                jax.ShapeDtypeStruct((n_pad, D), latents.dtype),
                jax.ShapeDtypeStruct((num_tiles, 1, 128), jnp.float32),
            ),
            grid_spec=pltpu.PrefetchScalarGridSpec(
                num_scalar_prefetch=0,
                grid=(num_tiles,),
                in_specs=[
                    pl.BlockSpec((tn, D), lambda i: (i, 0)),       # latents tile
                    resident_spec((1, K)),                         # ||e_k||^2
                    resident_spec((D, K)),                         # -2 * codebook^T
                    resident_spec((K, D)),                         # codebook
                ],
                out_specs=[
                    pl.BlockSpec((tn, D), lambda i: (i, 0)),           # quantized
                    pl.BlockSpec((1, 1, 128), lambda i: (i, 0, 0)),    # partial SSE
                ],
            ),
            compiler_params=pltpu.CompilerParams(
                # Tiles are independent -> on v7x the grid is sharded across
                # both TensorCores.
                dimension_semantics=("parallel",),
                vmem_limit_bytes=int(budget),
            ),
        )

    try:
        q_flat, sse_parts = _build(True)(flat, cb_sq, neg2cbt, cb_f32)
    except Exception:
        # Fallback for JAX builds where single-buffered (pl.Buffered(1)) block
        # specs are not supported by the TPU pallas_call pipeliner.
        q_flat, sse_parts = _build(False)(flat, cb_sq, neg2cbt, cb_f32)

    sse = jnp.sum(sse_parts[:, 0, 0])
    mse = sse / jnp.float32(N * D)
    # commitment_loss and embedding_loss are numerically identical in forward.
    vq_loss = mse * beta + mse
    quantized = q_flat[:N].reshape(orig_shape)
    # Straight-through estimator: the forward value is exactly `quantized`.
    return quantized, vq_loss


def _reference(latents, codebook, beta=0.25):
    D = codebook.shape[1]
    flat = latents.reshape(-1, D).astype(jnp.float32)
    cb = codebook.astype(jnp.float32)
    dist = (
        jnp.sum(flat**2, -1, keepdims=True)
        + jnp.sum(cb**2, -1)[None, :]
        - 2.0 * jnp.dot(flat, cb.T, precision=jax.lax.Precision.HIGHEST)
    )
    idx = jnp.argmin(dist, axis=-1)
    q = cb[idx].reshape(latents.shape).astype(latents.dtype)
    mse = jnp.mean((q.astype(jnp.float32) - latents.astype(jnp.float32)) ** 2)
    return q, mse * beta + mse


if __name__ == "__main__":
    key = jax.random.PRNGKey(0)
    k_cb, k_x = jax.random.split(key)

    num_embeddings, embedding_dim = 128, 32
    beta = 0.25
    # nn.Embedding weight init: uniform(-1/K, 1/K), done deterministically here.
    codebook = jax.random.uniform(
        k_cb, (num_embeddings, embedding_dim), jnp.float32,
        minval=-1.0 / num_embeddings, maxval=1.0 / num_embeddings,
    )
    # channel-last latents (B, H, W, D)
    latents = jax.random.normal(k_x, (2, 8, 8, embedding_dim), jnp.float32)

    q_ref, loss_ref = _reference(latents, codebook, beta=beta)

    # 1) auto tile selection: >= 2 tiles (both v7x TensorCores), no padding.
    quantized, vq_loss = vector_quantize(latents, codebook, beta=beta)
    jax.block_until_ready((quantized, vq_loss))
    assert np.allclose(np.asarray(quantized), np.asarray(q_ref), atol=1e-5)
    assert np.allclose(np.asarray(vq_loss), np.asarray(loss_ref), atol=1e-6)

    # 2) small tile that does not divide N: exercises multi-tile grid, padding,
    #    and the last-tile-only masked-SSE path.
    quantized2, vq_loss2 = vector_quantize(latents, codebook, beta=beta, tile_n=48)
    jax.block_until_ready((quantized2, vq_loss2))
    assert np.allclose(np.asarray(quantized2), np.asarray(q_ref), atol=1e-5)
    assert np.allclose(np.asarray(vq_loss2), np.asarray(loss_ref), atol=1e-6)

    print("KERNEL_OK")
</pallas_src>

<mosaic_0001>
module attributes {stable_mosaic.version = 11 : i64} {
  func.func @_vq_kernel(%arg0: i32, %arg1: memref<64x32xf32, #tpu.memory_space<vmem>>, %arg2: memref<1x128xf32, #tpu.memory_space<vmem>>, %arg3: memref<32x128xf32, #tpu.memory_space<vmem>>, %arg4: memref<128x32xf32, #tpu.memory_space<vmem>>, %arg5: memref<64x32xf32, #tpu.memory_space<vmem>>, %arg6: memref<1x1x128xf32, #tpu.memory_space<vmem>>) attributes {dimension_semantics = [#tpu.dimension_semantics<parallel>], iteration_bounds = array<i64: 2>, scalar_prefetch = 0 : i64, scratch_operands = 0 : i64, tpu.core_type = #tpu.core_type<tc>, window_params = [{transform_indices = @transform_0, window_bounds = array<i64: 64, 32>}, {pipeline_mode = #tpu.pipeline_mode<synchronous>, transform_indices = @transform_1, window_bounds = array<i64: 1, 128>}, {pipeline_mode = #tpu.pipeline_mode<synchronous>, transform_indices = @transform_2, window_bounds = array<i64: 32, 128>}, {pipeline_mode = #tpu.pipeline_mode<synchronous>, transform_indices = @transform_3, window_bounds = array<i64: 128, 32>}, {transform_indices = @transform_4, window_bounds = array<i64: 64, 32>}, {transform_indices = @transform_5, window_bounds = array<i64: 1, 1, 128>}]} {
    %c0 = arith.constant 0 : index
    %c0_0 = arith.constant 0 : index
    %0 = vector.load %arg1[%c0, %c0_0] : memref<64x32xf32, #tpu.memory_space<vmem>>, vector<64x32xf32>
    %c0_1 = arith.constant 0 : index
    %c0_2 = arith.constant 0 : index
    %1 = vector.load %arg4[%c0_1, %c0_2] : memref<128x32xf32, #tpu.memory_space<vmem>>, vector<128x32xf32>
    %c0_3 = arith.constant 0 : index
    %c0_4 = arith.constant 0 : index
    %2 = vector.load %arg1[%c0_3, %c0_4] : memref<64x32xf32, #tpu.memory_space<vmem>>, vector<64x32xf32>
    %c0_5 = arith.constant 0 : index
    %c0_6 = arith.constant 0 : index
    %3 = vector.load %arg3[%c0_5, %c0_6] : memref<32x128xf32, #tpu.memory_space<vmem>>, vector<32x128xf32>
    %cst = arith.constant dense<0.000000e+00> : vector<64x128xf32>
    %4 = tpu.matmul %2, %3, %cst {dimension_numbers = #tpu.dot_dimension_numbers<[1], [0], [0], [1], [0, 0, 1, 1], [], []>} : vector<64x32xf32>, vector<32x128xf32>, vector<64x128xf32> -> vector<64x128xf32>
    %c0_7 = arith.constant 0 : index
    %c0_8 = arith.constant 0 : index
    %5 = vector.load %arg2[%c0_7, %c0_8] : memref<1x128xf32, #tpu.memory_space<vmem>>, vector<1x128xf32>
    %6 = vector.broadcast %5 : vector<1x128xf32> to vector<64x128xf32>
    %7 = arith.addf %4, %6 : vector<64x128xf32>
    %cst_9 = arith.constant dense<0x7F800000> : vector<64xf32>
    %8 = vector.multi_reduction <minimumf>, %7, %cst_9 [1] : vector<64x128xf32> to vector<64xf32>
    %9 = vector.shape_cast %8 : vector<64xf32> to vector<64x1xf32>
    %10 = tpu.iota {dimensions = array<i32: 1>} : vector<64x128xi32>
    %11 = vector.broadcast %9 : vector<64x1xf32> to vector<64x128xf32>
    %12 = arith.cmpf oeq, %7, %11 : vector<64x128xf32>
    %c128_i32 = arith.constant 128 : i32
    %13 = vector.broadcast %c128_i32 : i32 to vector<64x128xi32>
    %14 = arith.select %12, %10, %13 : vector<64x128xi1>, vector<64x128xi32>
    %cst_10 = arith.constant dense<2147483647> : vector<64xi32>
    %15 = vector.multi_reduction <minsi>, %14, %cst_10 [1] : vector<64x128xi32> to vector<64xi32>
    %16 = vector.shape_cast %15 : vector<64xi32> to vector<64x1xi32>
    %17 = vector.broadcast %16 : vector<64x1xi32> to vector<64x128xi32>
    %18 = arith.cmpi eq, %10, %17 : vector<64x128xi32>
    %19 = arith.extui %18 : vector<64x128xi1> to vector<64x128xi32>
    %20 = arith.sitofp %19 : vector<64x128xi32> to vector<64x128xf32>
    %cst_11 = arith.constant dense<0.000000e+00> : vector<64x32xf32>
    %21 = tpu.matmul %20, %1, %cst_11 {dimension_numbers = #tpu.dot_dimension_numbers<[1], [0], [0], [1], [0, 0, 1, 1], [], []>} : vector<64x128xf32>, vector<128x32xf32>, vector<64x32xf32> -> vector<64x32xf32>
    %c0_12 = arith.constant 0 : index
    %c0_13 = arith.constant 0 : index
    %22 = vector.load %arg5[%c0_12, %c0_13] : memref<64x32xf32, #tpu.memory_space<vmem>>, vector<64x32xf32>
    tpu.vector_store %arg5[%c0_12, %c0_13], %21 {strides = array<i32>} : memref<64x32xf32, #tpu.memory_space<vmem>>, vector<64x32xf32>,
    %23 = arith.subf %21, %0 : vector<64x32xf32>
    %24 = arith.mulf %23, %23 : vector<64x32xf32>
    %25 = vector.shape_cast %24 : vector<64x32xf32> to vector<1x64x32xf32>
    %cst_14 = arith.constant dense<0.000000e+00> : vector<1xf32>
    %26 = vector.multi_reduction <add>, %25, %cst_14 [1, 2] : vector<1x64x32xf32> to vector<1xf32>
    %27 = vector.shape_cast %26 : vector<1xf32> to vector<1x1x1xf32>
    %28 = vector.extract %27[0, 0, 0] : f32 from vector<1x1x1xf32>
    %29 = vector.broadcast %28 : f32 to vector<1x1x128xf32>
    %c0_15 = arith.constant 0 : index
    %c0_16 = arith.constant 0 : index
    %c0_17 = arith.constant 0 : index
    %30 = vector.load %arg6[%c0_15, %c0_16, %c0_17] : memref<1x1x128xf32, #tpu.memory_space<vmem>>, vector<1x1x128xf32>
    tpu.vector_store %arg6[%c0_15, %c0_16, %c0_17], %29 {strides = array<i32>} : memref<1x1x128xf32, #tpu.memory_space<vmem>>, vector<1x1x128xf32>,
    return
  }
  func.func @transform_0(%arg0: i32) -> (i32, i32) {
    %c0_i32 = arith.constant 0 : i32
    %c0_i32_0 = arith.constant 0 : i32
    return %arg0, %c0_i32 : i32, i32
  }
  func.func @transform_1(%arg0: i32) -> (i32, i32) {
    %c0_i32 = arith.constant 0 : i32
    %c0_i32_0 = arith.constant 0 : i32
    %c0_i32_1 = arith.constant 0 : i32
    return %c0_i32, %c0_i32_0 : i32, i32
  }
  func.func @transform_2(%arg0: i32) -> (i32, i32) {
    %c0_i32 = arith.constant 0 : i32
    %c0_i32_0 = arith.constant 0 : i32
    %c0_i32_1 = arith.constant 0 : i32
    return %c0_i32, %c0_i32_0 : i32, i32
  }
  func.func @transform_3(%arg0: i32) -> (i32, i32) {
    %c0_i32 = arith.constant 0 : i32
    %c0_i32_0 = arith.constant 0 : i32
    %c0_i32_1 = arith.constant 0 : i32
    return %c0_i32, %c0_i32_0 : i32, i32
  }
  func.func @transform_4(%arg0: i32) -> (i32, i32) {
    %c0_i32 = arith.constant 0 : i32
    %c0_i32_0 = arith.constant 0 : i32
    return %arg0, %c0_i32 : i32, i32
  }
  func.func @transform_5(%arg0: i32) -> (i32, i32, i32) {
    %c0_i32 = arith.constant 0 : i32
    %c0_i32_0 = arith.constant 0 : i32
    %c0_i32_1 = arith.constant 0 : i32
    return %arg0, %c0_i32, %c0_i32_0 : i32, i32, i32
  }
}

module attributes {stable_mosaic.version = 11 : i64} {
  func.func @_vq_kernel(%arg0: i32, %arg1: memref<64x32xf32, #tpu.memory_space<vmem>>, %arg2: memref<1x128xf32, #tpu.memory_space<vmem>>, %arg3: memref<32x128xf32, #tpu.memory_space<vmem>>, %arg4: memref<128x32xf32, #tpu.memory_space<vmem>>, %arg5: memref<64x32xf32, #tpu.memory_space<vmem>>, %arg6: memref<1x1x128xf32, #tpu.memory_space<vmem>>) attributes {dimension_semantics = [#tpu.dimension_semantics<parallel>], iteration_bounds = array<i64: 2>, scalar_prefetch = 0 : i64, scratch_operands = 0 : i64, tpu.core_type = #tpu.core_type<tc>, window_params = [{transform_indices = @transform_0, window_bounds = array<i64: 64, 32>}, {pipeline_mode = #tpu.pipeline_mode<synchronous>, transform_indices = @transform_1, window_bounds = array<i64: 1, 128>}, {pipeline_mode = #tpu.pipeline_mode<synchronous>, transform_indices = @transform_2, window_bounds = array<i64: 32, 128>}, {pipeline_mode = #tpu.pipeline_mode<synchronous>, transform_indices = @transform_3, window_bounds = array<i64: 128, 32>}, {transform_indices = @transform_4, window_bounds = array<i64: 64, 32>}, {transform_indices = @transform_5, window_bounds = array<i64: 1, 1, 128>}]} {
    %c0 = arith.constant 0 : index
    %c0_0 = arith.constant 0 : index
    %0 = vector.load %arg1[%c0, %c0_0] : memref<64x32xf32, #tpu.memory_space<vmem>>, vector<64x32xf32>
    %c0_1 = arith.constant 0 : index
    %c0_2 = arith.constant 0 : index
    %1 = vector.load %arg4[%c0_1, %c0_2] : memref<128x32xf32, #tpu.memory_space<vmem>>, vector<128x32xf32>
    %c0_3 = arith.constant 0 : index
    %c0_4 = arith.constant 0 : index
    %2 = vector.load %arg1[%c0_3, %c0_4] : memref<64x32xf32, #tpu.memory_space<vmem>>, vector<64x32xf32>
    %c0_5 = arith.constant 0 : index
    %c0_6 = arith.constant 0 : index
    %3 = vector.load %arg3[%c0_5, %c0_6] : memref<32x128xf32, #tpu.memory_space<vmem>>, vector<32x128xf32>
    %cst = arith.constant dense<0.000000e+00> : vector<64x128xf32>
    %4 = tpu.matmul %2, %3, %cst {dimension_numbers = #tpu.dot_dimension_numbers<[1], [0], [0], [1], [0, 0, 1, 1], [], []>} : vector<64x32xf32>, vector<32x128xf32>, vector<64x128xf32> -> vector<64x128xf32>
    %c0_7 = arith.constant 0 : index
    %c0_8 = arith.constant 0 : index
    %5 = vector.load %arg2[%c0_7, %c0_8] : memref<1x128xf32, #tpu.memory_space<vmem>>, vector<1x128xf32>
    %6 = vector.broadcast %5 : vector<1x128xf32> to vector<64x128xf32>
    %7 = arith.addf %4, %6 : vector<64x128xf32>
    %cst_9 = arith.constant dense<0x7F800000> : vector<64xf32>
    %8 = vector.multi_reduction <minimumf>, %7, %cst_9 [1] : vector<64x128xf32> to vector<64xf32>
    %9 = vector.shape_cast %8 : vector<64xf32> to vector<64x1xf32>
    %10 = tpu.iota {dimensions = array<i32: 1>} : vector<64x128xi32>
    %11 = vector.broadcast %9 : vector<64x1xf32> to vector<64x128xf32>
    %12 = arith.cmpf oeq, %7, %11 : vector<64x128xf32>
    %c128_i32 = arith.constant 128 : i32
    %13 = vector.broadcast %c128_i32 : i32 to vector<64x128xi32>
    %14 = arith.select %12, %10, %13 : vector<64x128xi1>, vector<64x128xi32>
    %cst_10 = arith.constant dense<2147483647> : vector<64xi32>
    %15 = vector.multi_reduction <minsi>, %14, %cst_10 [1] : vector<64x128xi32> to vector<64xi32>
    %16 = vector.shape_cast %15 : vector<64xi32> to vector<64x1xi32>
    %17 = vector.broadcast %16 : vector<64x1xi32> to vector<64x128xi32>
    %18 = arith.cmpi eq, %10, %17 : vector<64x128xi32>
    %19 = arith.extui %18 : vector<64x128xi1> to vector<64x128xi32>
    %20 = arith.sitofp %19 : vector<64x128xi32> to vector<64x128xf32>
    %cst_11 = arith.constant dense<0.000000e+00> : vector<64x32xf32>
    %21 = tpu.matmul %20, %1, %cst_11 {dimension_numbers = #tpu.dot_dimension_numbers<[1], [0], [0], [1], [0, 0, 1, 1], [], []>} : vector<64x128xf32>, vector<128x32xf32>, vector<64x32xf32> -> vector<64x32xf32>
    %c0_12 = arith.constant 0 : index
    %c0_13 = arith.constant 0 : index
    %22 = vector.load %arg5[%c0_12, %c0_13] : memref<64x32xf32, #tpu.memory_space<vmem>>, vector<64x32xf32>
    tpu.vector_store %arg5[%c0_12, %c0_13], %21 {strides = array<i32>} : memref<64x32xf32, #tpu.memory_space<vmem>>, vector<64x32xf32>,
    %23 = arith.subf %21, %0 : vector<64x32xf32>
    %24 = arith.mulf %23, %23 : vector<64x32xf32>
    %25 = vector.shape_cast %24 : vector<64x32xf32> to vector<1x64x32xf32>
    %cst_14 = arith.constant dense<0.000000e+00> : vector<1xf32>
    %26 = vector.multi_reduction <add>, %25, %cst_14 [1, 2] : vector<1x64x32xf32> to vector<1xf32>
    %27 = vector.shape_cast %26 : vector<1xf32> to vector<1x1x1xf32>
    %28 = vector.extract %27[0, 0, 0] : f32 from vector<1x1x1xf32>
    %29 = vector.broadcast %28 : f32 to vector<1x1x128xf32>
    %c0_15 = arith.constant 0 : index
    %c0_16 = arith.constant 0 : index
    %c0_17 = arith.constant 0 : index
    %30 = vector.load %arg6[%c0_15, %c0_16, %c0_17] : memref<1x1x128xf32, #tpu.memory_space<vmem>>, vector<1x1x128xf32>
    tpu.vector_store %arg6[%c0_15, %c0_16, %c0_17], %29 {strides = array<i32>} : memref<1x1x128xf32, #tpu.memory_space<vmem>>, vector<1x1x128xf32>,
    return
  }
  func.func @transform_0(%arg0: i32) -> (i32, i32) {
    %c0_i32 = arith.constant 0 : i32
    %c0_i32_0 = arith.constant 0 : i32
    return %arg0, %c0_i32 : i32, i32
  }
  func.func @transform_1(%arg0: i32) -> (i32, i32) {
    %c0_i32 = arith.constant 0 : i32
    %c0_i32_0 = arith.constant 0 : i32
    %c0_i32_1 = arith.constant 0 : i32
    return %c0_i32, %c0_i32_0 : i32, i32
  }
  func.func @transform_2(%arg0: i32) -> (i32, i32) {
    %c0_i32 = arith.constant 0 : i32
    %c0_i32_0 = arith.constant 0 : i32
    %c0_i32_1 = arith.constant 0 : i32
    return %c0_i32, %c0_i32_0 : i32, i32
  }
  func.func @transform_3(%arg0: i32) -> (i32, i32) {
    %c0_i32 = arith.constant 0 : i32
    %c0_i32_0 = arith.constant 0 : i32
    %c0_i32_1 = arith.constant 0 : i32
    return %c0_i32, %c0_i32_0 : i32, i32
  }
  func.func @transform_4(%arg0: i32) -> (i32, i32) {
    %c0_i32 = arith.constant 0 : i32
    %c0_i32_0 = arith.constant 0 : i32
    return %arg0, %c0_i32 : i32, i32
  }
  func.func @transform_5(%arg0: i32) -> (i32, i32, i32) {
    %c0_i32 = arith.constant 0 : i32
    %c0_i32_0 = arith.constant 0 : i32
    %c0_i32_1 = arith.constant 0 : i32
    return %arg0, %c0_i32, %c0_i32_0 : i32, i32, i32
  }
}

</mosaic_0001>

<llo_original>
// kernel: tpu_custom_call.1
$region0: #{tpu_custom_call.1}
  #allocation0 [shape = 'u32[]', space=smem, size = 0x4, offset = 0x4, fixed_abs, tag = 'smem constant byte address 0x4 - core index']
  #allocation1 [shape = 'u32[144,128]{1,0:T(1,128)}', space=vmem, size = 0x12000, scoped, tag = 'internal scratch']
  %s0 = inlined_call_operand.vmem [shape: f32[128,32], index: 0, kind: input, shape index: {}]
  %s1 = inlined_call_operand.vmem [shape: f32[1,128], index: 1, kind: input, shape index: {}]
  %s2 = inlined_call_operand.vmem [shape: f32[32,128], index: 2, kind: input, shape index: {}]
  %s3 = inlined_call_operand.vmem [shape: f32[128,32], index: 3, kind: input, shape index: {}]
  %s4 = inlined_call_operand.vmem [shape: f32[128,32], index: 4, kind: output, shape index: {0}]
  %s5 = inlined_call_operand.hbm [shape: f32[2,1,128], index: 5, kind: output, shape index: {1}]
  %6 = xla_tuple %s4, %s5
  %s7 = sld [smem:[#allocation0]]
  $region57: #{tpu_custom_call.1} parent=0
    _
  %s9 = ssub.s32 1, %s7
  %s10 = scalar_select 0, %s9, %s7
  $region1: #{tpu_custom_call.1} parent=0
    #allocation2 [shape = 'u8[1024]{0}', space=vmem, size = 0x400, scoped, tag = 'output window, operand 1']
    #allocation3 [shape = 's32[2]{0}', space=sflag, size = 0x8, scoped, tag = 'scoped memory for tpu_custom_call.1']
    %11 = vsyncpa [#allocation3], 0
    %s12 = scalar_lea.sflag [#allocation3], 1
    %13 = vsyncpa %s12, 0
    loop: start=0, step=1, limit=4
    $region2: #{tpu_custom_call.1} parent=1 // loop_pre_header
      _
    $region3: #{tpu_custom_call.1} parent=1 // loop_header
      %s15 = sphi 0, %s19
      %p16 = scmp.ge.s32.totalorder %s15, 4
      %s25 = sphi 0, %s27
      %s28 = sphi 0, %s25
      %s29 = sphi 0, %s28
      %s45 = sphi 0, %s29
      %s49 = sphi 0, %s49
      %s51 = sphi 0, %s49
      %s52 = sphi 0, %s51
      %s66 = sphi 0, %s52
      %s70 = sphi 0, %s70
      %s72 = sphi 0, %s70
      %s73 = sphi 0, %s72
      %s87 = sphi 0, %s73
      %s91 = sphi 0, %s91
      %s93 = sphi 0, %s91
      %s94 = sphi 0, %s93
      %s108 = sphi 0, %s94
      %s114 = sphi 0, %s116
      %s117 = sphi 0, %s114
      %s118 = sphi 0, %s117
      %s134 = sphi 0, %s118
      %s140 = sphi 0, %s142
      %s143 = sphi 0, %s140
      %s144 = sphi 0, %s143
      %s160 = sphi 0, %s144
    $region4: #{tpu_custom_call.1} parent=1 // loop_header_branch
      %18 = sbr.rel (%p16) target = $region8
    $region5: #{tpu_custom_call.1} parent=1 // loop_body
      %s20 = ssub.s32 %s15, 1
      %s21 = ssub.s32 %s15, 2
      %s22 = sadd.s32 %s15, 1
      %s23 = ssub.s32 %s15, %s22
      %p24 = scmp.eq.s32.totalorder %s23, 0
      %s26 = sadd.s32 %s25, 1
      %s27 = scalar_select %p24, %s25, %s26
      %p30 = pneg %p24
      %p31 = scmp.eq.s32.totalorder %s15, 1
      %p32 = por %p30, %p31
      %p33 = scmp.ne.s32.totalorder %s25, %s28
      %p34 = scmp.eq.s32.totalorder %s15, 0
      %p35 = por %p33, %p34
      %p36 = scmp.ne.s32.totalorder %s25, %s28
      %p37 = scmp.eq.s32.totalorder %s20, 1
      %p38 = por %p36, %p37
      %p39 = scmp.ne.s32.totalorder %s28, %s29
      %p40 = scmp.eq.s32.totalorder %s20, 0
      %p41 = por %p39, %p40
      %p42 = scmp.ne.s32.totalorder %s28, %s29
      %p43 = scmp.eq.s32.totalorder %s21, 1
      %p44 = por %p42, %p43
      %p46 = scmp.ne.s32.totalorder %s29, %s45
      %p47 = scmp.eq.s32.totalorder %s21, 0
      %p48 = por %p46, %p47
      %s50 = sadd.s32 %s49, 1
      %p53 = scmp.eq.s32.totalorder %s15, 1
      %p54 = scmp.ne.s32.totalorder %s49, %s51
      %p55 = scmp.eq.s32.totalorder %s15, 0
      %p56 = por %p54, %p55
      %p57 = scmp.ne.s32.totalorder %s49, %s51
      %p58 = scmp.eq.s32.totalorder %s20, 1
      %p59 = por %p57, %p58
      %p60 = scmp.ne.s32.totalorder %s51, %s52
      %p61 = scmp.eq.s32.totalorder %s20, 0
      %p62 = por %p60, %p61
      %p63 = scmp.ne.s32.totalorder %s51, %s52
      %p64 = scmp.eq.s32.totalorder %s21, 1
      %p65 = por %p63, %p64
      %p67 = scmp.ne.s32.totalorder %s52, %s66
      %p68 = scmp.eq.s32.totalorder %s21, 0
      %p69 = por %p67, %p68
      %s71 = sadd.s32 %s70, 1
      %p74 = scmp.eq.s32.totalorder %s15, 1
      %p75 = scmp.ne.s32.totalorder %s70, %s72
      %p76 = scmp.eq.s32.totalorder %s15, 0
      %p77 = por %p75, %p76
      %p78 = scmp.ne.s32.totalorder %s70, %s72
      %p79 = scmp.eq.s32.totalorder %s20, 1
      %p80 = por %p78, %p79
      %p81 = scmp.ne.s32.totalorder %s72, %s73
      %p82 = scmp.eq.s32.totalorder %s20, 0
      %p83 = por %p81, %p82
      %p84 = scmp.ne.s32.totalorder %s72, %s73
      %p85 = scmp.eq.s32.totalorder %s21, 1
      %p86 = por %p84, %p85
      %p88 = scmp.ne.s32.totalorder %s73, %s87
      %p89 = scmp.eq.s32.totalorder %s21, 0
      %p90 = por %p88, %p89
      %s92 = sadd.s32 %s91, 1
      %p95 = scmp.eq.s32.totalorder %s15, 1
      %p96 = scmp.ne.s32.totalorder %s91, %s93
      %p97 = scmp.eq.s32.totalorder %s15, 0
      %p98 = por %p96, %p97
      %p99 = scmp.ne.s32.totalorder %s91, %s93
      %p100 = scmp.eq.s32.totalorder %s20, 1
      %p101 = por %p99, %p100
      %p102 = scmp.ne.s32.totalorder %s93, %s94
      %p103 = scmp.eq.s32.totalorder %s20, 0
      %p104 = por %p102, %p103
      %p105 = scmp.ne.s32.totalorder %s93, %s94
      %p106 = scmp.eq.s32.totalorder %s21, 1
      %p107 = por %p105, %p106
      %p109 = scmp.ne.s32.totalorder %s94, %s108
      %p110 = scmp.eq.s32.totalorder %s21, 0
      %p111 = por %p109, %p110
      %s112 = ssub.s32 %s15, %s22
      %p113 = scmp.eq.s32.totalorder %s112, 0
      %s115 = sadd.s32 %s114, 1
      %s116 = scalar_select %p113, %s114, %s115
      %p119 = pneg %p113
      %p120 = scmp.eq.s32.totalorder %s15, 1
      %p121 = por %p119, %p120
      %p122 = scmp.ne.s32.totalorder %s114, %s117
      %p123 = scmp.eq.s32.totalorder %s15, 0
      %p124 = por %p122, %p123
      %p125 = scmp.ne.s32.totalorder %s114, %s117
      %p126 = scmp.eq.s32.totalorder %s20, 1
      %p127 = por %p125, %p126
      %p128 = scmp.ne.s32.totalorder %s117, %s118
      %p129 = scmp.eq.s32.totalorder %s20, 0
      %p130 = por %p128, %p129
      %p131 = scmp.ne.s32.totalorder %s117, %s118
      %p132 = scmp.eq.s32.totalorder %s21, 1
      %p133 = por %p131, %p132
      %p135 = scmp.ne.s32.totalorder %s118, %s134
      %p136 = scmp.eq.s32.totalorder %s21, 0
      %p137 = por %p135, %p136
      %s138 = ssub.s32 %s15, %s22
      %p139 = scmp.eq.s32.totalorder %s138, 0
      %s141 = sadd.s32 %s140, 1
      %s142 = scalar_select %p139, %s140, %s141
      %p145 = pneg %p139
      %p146 = scmp.eq.s32.totalorder %s15, 1
      %p147 = por %p145, %p146
      %p148 = scmp.ne.s32.totalorder %s140, %s143
      %p149 = scmp.eq.s32.totalorder %s15, 0
      %p150 = por %p148, %p149
      %p151 = scmp.ne.s32.totalorder %s140, %s143
      %p152 = scmp.eq.s32.totalorder %s20, 1
      %p153 = por %p151, %p152
      %p154 = scmp.ne.s32.totalorder %s143, %s144
      %p155 = scmp.eq.s32.totalorder %s20, 0
      %p156 = por %p154, %p155
      %p157 = scmp.ne.s32.totalorder %s143, %s144
      %p158 = scmp.eq.s32.totalorder %s21, 1
      %p159 = por %p157, %p158
      %p161 = scmp.ne.s32.totalorder %s144, %s160
      %p162 = scmp.eq.s32.totalorder %s21, 0
      %p163 = por %p161, %p162
      %p164 = scmp.le.s32.totalorder 1, %s15
      %p165 = scmp.lt.s32.totalorder %s15, 3
      %p166 = pnand %p164, %p165
      %p167 = pneg %p166
      // Predicated region
      $region9: #{tpu_custom_call.1} parent=5 // pred_check
        _
      $region10: #{tpu_custom_call.1} parent=5 // pred_check_branch
        %169 = sbr.rel (%p166) target = $region12
      $region11: #{tpu_custom_call.1} parent=5 // pred_region
        %s170 = ssub.s32 %s15, 1
        // Predicated region
        $region13: #{tpu_custom_call.1} parent=11 // pred_check
          %p171 = pneg %p62
        $region14: #{tpu_custom_call.1} parent=11 // pred_check_branch
          %173 = sbr.rel (%p171) target = $region16
        $region15: #{tpu_custom_call.1} parent=11 // pred_region
          _
        $region16: #{tpu_custom_call.1} parent=11 // pred_fallthru
          _
        // Predicated region
        $region17: #{tpu_custom_call.1} parent=11 // pred_check
          %p174 = pneg %p83
        $region18: #{tpu_custom_call.1} parent=11 // pred_check_branch
          %176 = sbr.rel (%p174) target = $region20
        $region19: #{tpu_custom_call.1} parent=11 // pred_region
          _
        $region20: #{tpu_custom_call.1} parent=11 // pred_fallthru
          _
        // Predicated region
        $region21: #{tpu_custom_call.1} parent=11 // pred_check
          %p177 = pneg %p104
        $region22: #{tpu_custom_call.1} parent=11 // pred_check_branch
          %179 = sbr.rel (%p177) target = $region24
        $region23: #{tpu_custom_call.1} parent=11 // pred_region
          _
        $region24: #{tpu_custom_call.1} parent=11 // pred_fallthru
          _
      $region12: #{tpu_custom_call.1} parent=5 // pred_fallthru
        _
      %p180 = scmp.lt.s32.totalorder %s15, 2
      // Predicated region
      $region25: #{tpu_custom_call.1} parent=5 // pred_check
        %p181 = pneg %p180
      $region26: #{tpu_custom_call.1} parent=5 // pred_check_branch
        %183 = sbr.rel (%p181) target = $region28
      $region27: #{tpu_custom_call.1} parent=5 // pred_region
        // Predicated region
        $region29: #{tpu_custom_call.1} parent=27 // pred_check
          %p184 = pneg %p35
        $region30: #{tpu_custom_call.1} parent=27 // pred_check_branch
          %186 = sbr.rel (%p184) target = $region32
        $region31: #{tpu_custom_call.1} parent=27 // pred_region
          %s187 = smul.u32 8, %s15
          %p188 = scmp.lt.s32.totalorder %s187, 15
          %s189 = scalar_select %p188, %s187, 15
          %s190 = smul.addr %s189, 8
          %s191 = scalar_lea.vmem %s0, %s190
          %s192 = smul.u32 8, %s15
        $region32: #{tpu_custom_call.1} parent=27 // pred_fallthru
          _
      $region28: #{tpu_custom_call.1} parent=5 // pred_fallthru
        _
      %p193 = scmp.le.s32.totalorder 1, %s15
      %p194 = scmp.lt.s32.totalorder %s15, 3
      %p195 = pnand %p193, %p194
      %p196 = pneg %p195
      // Predicated region
      $region33: #{tpu_custom_call.1} parent=5 // pred_check
        _
      $region34: #{tpu_custom_call.1} parent=5 // pred_check_branch
        %198 = sbr.rel (%p195) target = $region36
      $region35: #{tpu_custom_call.1} parent=5 // pred_region
        %s199 = ssub.s32 %s15, 1
        %s200 = smul.u32 8, %s20
        %p201 = scmp.lt.s32.totalorder %s200, 15
        %s202 = scalar_select %p201, %s200, 15
        %s203 = smul.addr %s202, 8
        %s204 = scalar_lea.vmem %s0, %s203
        %p205 = pneg %p41
        %p206 = pneg %p38
        %p207 = pneg %p62
        %p208 = pneg %p59
        %p209 = pneg %p83
        %p210 = pneg %p80
        %p211 = pneg %p104
        %p212 = pneg %p101
        %p213 = pneg %p130
        %p214 = pneg %p127
        %s215 = smul.u32 8, %s20
        %p216 = scmp.lt.s32.totalorder %s215, 15
        %s217 = scalar_select %p216, %s215, 15
        %s218 = smul.addr %s217, 8
        %s219 = scalar_lea.vmem %s4, %s218
        %p220 = pneg %p156
        %p221 = pneg %p153
        %s222 = sand.u32 %s143, 1
        %s223 = scalar_lea.sflag [#allocation3], %s222
        %s224 = sand.u32 %s143, 1
        %s225 = scalar_lea.vmem [#allocation2], %s224
        %s226 = smul.u32 8, %s20
        %p227 = scmp.lt.s32.totalorder %s226, 15
        %s228 = scalar_select %p227, %s226, 15
        %s229 = smul.addr %s228, 8
        %s230 = scalar_lea.vmem %s0, %s229
        %s231 = smul.u32 8, %s20
        %s232 = smul.u32 8, %s20
        %p233 = scmp.lt.s32.totalorder %s232, 15
        %s234 = scalar_select %p233, %s232, 15
        %s235 = smul.addr %s234, 8
        %s236 = scalar_lea.vmem %s4, %s235
        %s237 = smul.u32 8, %s20
        %v238 = vld [vmem:[%s230] sm:$0xff]
        %v239 = vld [vmem:[%s230 + $0x8] sm:$0xff]
        %v240 = vld [vmem:[%s230 + $0x10] sm:$0xff]
        %v241 = vld [vmem:[%s230 + $0x18] sm:$0xff]
        %v242 = vld [vmem:[%s230 + $0x20] sm:$0xff]
        %v243 = vld [vmem:[%s230 + $0x28] sm:$0xff]
        %v244 = vld [vmem:[%s230 + $0x30] sm:$0xff]
        %v245 = vld [vmem:[%s230 + $0x38] sm:$0xff]
        %v246 = vld [vmem:[%s3] sm:$0xff]
        %v247 = vld [vmem:[%s3 + $0x8] sm:$0xff]
        %v248 = vld [vmem:[%s3 + $0x10] sm:$0xff]
        %v249 = vld [vmem:[%s3 + $0x18] sm:$0xff]
        %v250 = vld [vmem:[%s3 + $0x20] sm:$0xff]
        %v251 = vld [vmem:[%s3 + $0x28] sm:$0xff]
        %v252 = vld [vmem:[%s3 + $0x30] sm:$0xff]
        %v253 = vld [vmem:[%s3 + $0x38] sm:$0xff]
        %v254 = vld [vmem:[%s3 + $0x40] sm:$0xff]
        %v255 = vld [vmem:[%s3 + $0x48] sm:$0xff]
        %v256 = vld [vmem:[%s3 + $0x50] sm:$0xff]
        %v257 = vld [vmem:[%s3 + $0x58] sm:$0xff]
        %v258 = vld [vmem:[%s3 + $0x60] sm:$0xff]
        %v259 = vld [vmem:[%s3 + $0x68] sm:$0xff]
        %v260 = vld [vmem:[%s3 + $0x70] sm:$0xff]
        %v261 = vld [vmem:[%s3 + $0x78] sm:$0xff]
        %v262 = vld [vmem:[%s2] sm:$0xff]
        %v263 = vld [vmem:[%s2 + $0x8] sm:$0xff]
        %v264 = vld [vmem:[%s2 + $0x10] sm:$0xff]
        %v265 = vld [vmem:[%s2 + $0x18] sm:$0xff]
        %v266 = vld [vmem:[%s1] sm:$0x1]
        %v268 = vlaneseq
        %v269 = vshrl.u32 %v268, 7
        %v270 = vsub.s32 0, %v269
        %v271 = vrot.slane %v266, %v270
        %vm273 = vcmask 261120
        %v275 = vsel %vm273, %v238, 0
        %v278 = vsel %vm273, %v239, 0
        %v281 = vsel %vm273, %v240, 0
        %v284 = vsel %vm273, %v241, 0
        %v287 = vsel %vm273, %v242, 0
        %v290 = vsel %vm273, %v243, 0
        %v293 = vsel %vm273, %v244, 0
        %v296 = vsel %vm273, %v245, 0
        %298 = vmatprep.subr.mxu0 0.0
        %299 = vmatpush1.msra.mxu0 0.0
        %300 = vmatprep.subr.mxu0 0.0
        %301 = vmatpush1.msra.mxu0 0.0
        %302 = vmatprep.subr.mxu0 0.0
        %303 = vmatpush1.msra.mxu0 0.0
        %304 = vmatprep.subr.mxu0 0.0
        %305 = vmatpush1.msra.mxu0 0.0
        %306 = vmatprep.subr.mxu0 0.0
        %307 = vmatpush1.msra.mxu0 0.0
        %308 = vmatprep.subr.mxu0 0.0
        %309 = vmatpush1.msra.mxu0 0.0
        %310 = vmatprep.subr.mxu0 0.0
        %311 = vmatpush1.msra.mxu0 0.0
        %312 = vmatprep.subr.mxu0 0.0
        %313 = vmatpush1.msra.mxu0 0.0
        %314 = vmatprep.subr.mxu0 0.0
        %315 = vmatpush1.msra.mxu0 0.0
        %316 = vmatprep.subr.mxu0 0.0
        %317 = vmatpush1.msra.mxu0 0.0
        %318 = vmatprep.subr.mxu0 0.0
        %319 = vmatpush1.msra.mxu0 0.0
        %320 = vmatprep.subr.mxu0 0.0
        %321 = vmatpush1.msra.mxu0 0.0
        %322 = vmatprep.subr.mxu0 0.0
        %323 = vmatpush1.msra.mxu0 %v265
        %324 = vmatprep.subr.mxu0 0.0
        %325 = vmatpush1.msra.mxu0 %v264
        %326 = vmatprep.subr.mxu0 0.0
        %327 = vmatpush1.msra.mxu0 %v263
        %328 = vmatprep.subr.mxu0 0.0
        %329 = vmatpush1.msra.mxu0 %v262
        %330 = vmatprep.subr.mxu0 0.0
        %331 = vmatpush2.msra.mxu0 0.0
        %332 = vmatprep.subr.mxu0 0.0
        %333 = vmatpush2.msra.mxu0 0.0
        %334 = vmatprep.subr.mxu0 0.0
        %335 = vmatpush2.msra.mxu0 0.0
        %336 = vmatprep.subr.mxu0 0.0
        %337 = vmatpush2.msra.mxu0 0.0
        %338 = vmatprep.subr.mxu0 0.0
        %339 = vmatpush2.msra.mxu0 0.0
        %340 = vmatprep.subr.mxu0 0.0
        %341 = vmatpush2.msra.mxu0 0.0
        %342 = vmatprep.subr.mxu0 0.0
        %343 = vmatpush2.msra.mxu0 0.0
        %344 = vmatprep.subr.mxu0 0.0
        %345 = vmatpush2.msra.mxu0 0.0
        %346 = vmatprep.subr.mxu0 0.0
        %347 = vmatpush2.msra.mxu0 0.0
        %348 = vmatprep.subr.mxu0 0.0
        %349 = vmatpush2.msra.mxu0 0.0
        %350 = vmatprep.subr.mxu0 0.0
        %351 = vmatpush2.msra.mxu0 0.0
        %352 = vmatprep.subr.mxu0 0.0
        %353 = vmatpush2.msra.mxu0 0.0
        %354 = vmatprep.subr.mxu0 0.0
        %355 = vmatpush2.msra.mxu0 0.0
        %356 = vmatprep.subr.mxu0 0.0
        %357 = vmatpush2.msra.mxu0 0.0
        %358 = vmatprep.subr.mxu0 0.0
        %359 = vmatpush2.msra.mxu0 0.0
        %360 = vmatprep.subr.mxu0 0.0
        %361 = vmatpush2.msra.mxu0 0.0
        %362 = vmatprep.mubr.f32.mxu0 0.0
        %363 = vmatmul.mubr.f32.gmra.mxu0 %v275
        %v364 = vpop.f32.mrf.mxu0
        %v365 = vadd.f32 %v271, %v364
        %v366 = vpop.f32.mrf.mxu0
        %367 = vmatprep.mubr.f32.mxu0 0.0
        %368 = vmatmul.mubr.f32.gmra.mxu0 %v278
        %v369 = vpop.f32.mrf.mxu0
        %v370 = vadd.f32 %v271, %v369
        %v371 = vpop.f32.mrf.mxu0
        %372 = vmatprep.mubr.f32.mxu0 0.0
        %373 = vmatmul.mubr.f32.gmra.mxu0 %v281
        %v374 = vpop.f32.mrf.mxu0
        %v375 = vadd.f32 %v271, %v374
        %v376 = vpop.f32.mrf.mxu0
        %377 = vmatprep.mubr.f32.mxu0 0.0
        %378 = vmatmul.mubr.f32.gmra.mxu0 %v284
        %v379 = vpop.f32.mrf.mxu0
        %v380 = vadd.f32 %v271, %v379
        %v381 = vpop.f32.mrf.mxu0
        %382 = vmatprep.mubr.f32.mxu0 0.0
        %383 = vmatmul.mubr.f32.gmra.mxu0 %v287
        %v384 = vpop.f32.mrf.mxu0
        %v385 = vadd.f32 %v271, %v384
        %v386 = vpop.f32.mrf.mxu0
        %387 = vmatprep.mubr.f32.mxu0 0.0
        %388 = vmatmul.mubr.f32.gmra.mxu0 %v290
        %v389 = vpop.f32.mrf.mxu0
        %v390 = vadd.f32 %v271, %v389
        %v391 = vpop.f32.mrf.mxu0
        %392 = vmatprep.mubr.f32.mxu0 0.0
        %393 = vmatmul.mubr.f32.gmra.mxu0 %v293
        %v394 = vpop.f32.mrf.mxu0
        %v395 = vadd.f32 %v271, %v394
        %v396 = vpop.f32.mrf.mxu0
        %397 = vmatprep.mubr.f32.mxu0 0.0
        %398 = vmatmul.mubr.f32.gmra.mxu0 %v296
        %v399 = vpop.f32.mrf.mxu0
        %v400 = vadd.f32 %v271, %v399
        %v401 = vpop.f32.mrf.mxu0
        %402 = vdwg.mxu0
        %403 = vmin.xlane.f32.xlu0 %v365
        %v404 = vpop.xlane.xlu0 %403
        %405 = vmin.xlane.f32.xlu0 %v370
        %v406 = vpop.xlane.xlu0 %405
        %407 = vmin.xlane.f32.xlu0 %v375
        %v408 = vpop.xlane.xlu0 %407
        %409 = vmin.xlane.f32.xlu0 %v380
        %v410 = vpop.xlane.xlu0 %409
        %411 = vmin.xlane.f32.xlu0 %v385
        %v412 = vpop.xlane.xlu0 %411
        %413 = vmin.xlane.f32.xlu0 %v390
        %v414 = vpop.xlane.xlu0 %413
        %415 = vmin.xlane.f32.xlu0 %v395
        %v416 = vpop.xlane.xlu0 %415
        %417 = vmin.xlane.f32.xlu0 %v400
        %v418 = vpop.xlane.xlu0 %417
        %v419 = vlaneseq
        %v420 = vand.u32 %v419, 127
        %vm421 = vcmp.eq.f32.partialorder %v365, %v404
        %vm422 = vcmp.eq.f32.partialorder %v370, %v406
        %vm423 = vcmp.eq.f32.partialorder %v375, %v408
        %vm424 = vcmp.eq.f32.partialorder %v380, %v410
        %vm425 = vcmp.eq.f32.partialorder %v385, %v412
        %vm426 = vcmp.eq.f32.partialorder %v390, %v414
        %vm427 = vcmp.eq.f32.partialorder %v395, %v416
        %vm428 = vcmp.eq.f32.partialorder %v400, %v418
        %v429 = vsel %vm421, %v420, 128
        %v430 = vsel %vm422, %v420, 128
        %v431 = vsel %vm423, %v420, 128
        %v432 = vsel %vm424, %v420, 128
        %v433 = vsel %vm425, %v420, 128
        %v434 = vsel %vm426, %v420, 128
        %v435 = vsel %vm427, %v420, 128
        %v436 = vsel %vm428, %v420, 128
        %v437 = vand.u32 %v429, 65535
        %v438 = vshra.s32 %v429, 16
        %v439 = vcvt.s32.f32 %v437
        %v440 = vcvt.s32.f32 %v438
        %441 = vmin.xlane.f32.xlu0 %v440
        %v442 = vpop.xlane.xlu0 %441
        %vm443 = vcmp.eq.f32.partialorder %v440, %v442
        %v444 = vsel %vm443, %v439, inf
        %445 = vmin.xlane.f32.xlu0 %v444
        %v446 = vpop.xlane.xlu0 %445
        %v447 = vcvt.f32.s32 %v446
        %v448 = vcvt.f32.s32 %v442
        %v449 = vshll.u32 %v448, 16
        %v450 = vadd.s32 %v449, %v447
        %v451 = vand.u32 %v430, 65535
        %v452 = vshra.s32 %v430, 16
        %v453 = vcvt.s32.f32 %v451
        %v454 = vcvt.s32.f32 %v452
        %455 = vmin.xlane.f32.xlu0 %v454
        %v456 = vpop.xlane.xlu0 %455
        %vm457 = vcmp.eq.f32.partialorder %v454, %v456
        %v458 = vsel %vm457, %v453, inf
        %459 = vmin.xlane.f32.xlu0 %v458
        %v460 = vpop.xlane.xlu0 %459
        %v461 = vcvt.f32.s32 %v460
        %v462 = vcvt.f32.s32 %v456
        %v463 = vshll.u32 %v462, 16
        %v464 = vadd.s32 %v463, %v461
        %v465 = vand.u32 %v431, 65535
        %v466 = vshra.s32 %v431, 16
        %v467 = vcvt.s32.f32 %v465
        %v468 = vcvt.s32.f32 %v466
        %469 = vmin.xlane.f32.xlu0 %v468
        %v470 = vpop.xlane.xlu0 %469
        %vm471 = vcmp.eq.f32.partialorder %v468, %v470
        %v472 = vsel %vm471, %v467, inf
        %473 = vmin.xlane.f32.xlu0 %v472
        %v474 = vpop.xlane.xlu0 %473
        %v475 = vcvt.f32.s32 %v474
        %v476 = vcvt.f32.s32 %v470
        %v477 = vshll.u32 %v476, 16
        %v478 = vadd.s32 %v477, %v475
        %v479 = vand.u32 %v432, 65535
        %v480 = vshra.s32 %v432, 16
        %v481 = vcvt.s32.f32 %v479
        %v482 = vcvt.s32.f32 %v480
        %483 = vmin.xlane.f32.xlu0 %v482
        %v484 = vpop.xlane.xlu0 %483
        %vm485 = vcmp.eq.f32.partialorder %v482, %v484
        %v486 = vsel %vm485, %v481, inf
        %487 = vmin.xlane.f32.xlu0 %v486
        %v488 = vpop.xlane.xlu0 %487
        %v489 = vcvt.f32.s32 %v488
        %v490 = vcvt.f32.s32 %v484
        %v491 = vshll.u32 %v490, 16
        %v492 = vadd.s32 %v491, %v489
        %v493 = vand.u32 %v433, 65535
        %v494 = vshra.s32 %v433, 16
        %v495 = vcvt.s32.f32 %v493
        %v496 = vcvt.s32.f32 %v494
        %497 = vmin.xlane.f32.xlu0 %v496
        %v498 = vpop.xlane.xlu0 %497
        %vm499 = vcmp.eq.f32.partialorder %v496, %v498
        %v500 = vsel %vm499, %v495, inf
        %501 = vmin.xlane.f32.xlu0 %v500
        %v502 = vpop.xlane.xlu0 %501
        %v503 = vcvt.f32.s32 %v502
        %v504 = vcvt.f32.s32 %v498
        %v505 = vshll.u32 %v504, 16
        %v506 = vadd.s32 %v505, %v503
        %v507 = vand.u32 %v434, 65535
        %v508 = vshra.s32 %v434, 16
        %v509 = vcvt.s32.f32 %v507
        %v510 = vcvt.s32.f32 %v508
        %511 = vmin.xlane.f32.xlu0 %v510
        %v512 = vpop.xlane.xlu0 %511
        %vm513 = vcmp.eq.f32.partialorder %v510, %v512
        %v514 = vsel %vm513, %v509, inf
        %515 = vmin.xlane.f32.xlu0 %v514
        %v516 = vpop.xlane.xlu0 %515
        %v517 = vcvt.f32.s32 %v516
        %v518 = vcvt.f32.s32 %v512
        %v519 = vshll.u32 %v518, 16
        %v520 = vadd.s32 %v519, %v517
        %v521 = vand.u32 %v435, 65535
        %v522 = vshra.s32 %v435, 16
        %v523 = vcvt.s32.f32 %v521
        %v524 = vcvt.s32.f32 %v522
        %525 = vmin.xlane.f32.xlu0 %v524
        %v526 = vpop.xlane.xlu0 %525
        %vm527 = vcmp.eq.f32.partialorder %v524, %v526
        %v528 = vsel %vm527, %v523, inf
        %529 = vmin.xlane.f32.xlu0 %v528
        %v530 = vpop.xlane.xlu0 %529
        %v531 = vcvt.f32.s32 %v530
        %v532 = vcvt.f32.s32 %v526
        %v533 = vshll.u32 %v532, 16
        %v534 = vadd.s32 %v533, %v531
        %v535 = vand.u32 %v436, 65535
        %v536 = vshra.s32 %v436, 16
        %v537 = vcvt.s32.f32 %v535
        %v538 = vcvt.s32.f32 %v536
        %539 = vmin.xlane.f32.xlu0 %v538
        %v540 = vpop.xlane.xlu0 %539
        %vm541 = vcmp.eq.f32.partialorder %v538, %v540
        %v542 = vsel %vm541, %v537, inf
        %543 = vmin.xlane.f32.xlu0 %v542
        %v544 = vpop.xlane.xlu0 %543
        %v545 = vcvt.f32.s32 %v544
        %v546 = vcvt.f32.s32 %v540
        %v547 = vshll.u32 %v546, 16
        %v548 = vadd.s32 %v547, %v545
        %vm549 = vcmp.eq.s32.totalorder %v420, %v450
        %vm550 = vcmp.eq.s32.totalorder %v420, %v464
        %vm551 = vcmp.eq.s32.totalorder %v420, %v478
        %vm552 = vcmp.eq.s32.totalorder %v420, %v492
        %vm553 = vcmp.eq.s32.totalorder %v420, %v506
        %vm554 = vcmp.eq.s32.totalorder %v420, %v520
        %vm555 = vcmp.eq.s32.totalorder %v420, %v534
        %vm556 = vcmp.eq.s32.totalorder %v420, %v548
        %v557 = vsel %vm549, 1, 0
        %v558 = vsel %vm550, 1, 0
        %v559 = vsel %vm551, 1, 0
        %v560 = vsel %vm552, 1, 0
        %v561 = vsel %vm553, 1, 0
        %v562 = vsel %vm554, 1, 0
        %v563 = vsel %vm555, 1, 0
        %v564 = vsel %vm556, 1, 0
        %v565 = vcvt.s32.f32 %v557
        %v566 = vcvt.s32.f32 %v558
        %v567 = vcvt.s32.f32 %v559
        %v568 = vcvt.s32.f32 %v560
        %v569 = vcvt.s32.f32 %v561
        %v570 = vcvt.s32.f32 %v562
        %v571 = vcvt.s32.f32 %v563
        %v572 = vcvt.s32.f32 %v564
        %573 = vmatprep.subr.mxu0 0.0
        %574 = vmatpush1.msra.mxu0 %v261
        %575 = vmatprep.subr.mxu0 0.0
        %576 = vmatpush1.msra.mxu0 %v260
        %577 = vmatprep.subr.mxu0 0.0
        %578 = vmatpush1.msra.mxu0 %v259
        %579 = vmatprep.subr.mxu0 0.0
        %580 = vmatpush1.msra.mxu0 %v258
        %581 = vmatprep.subr.mxu0 0.0
        %582 = vmatpush1.msra.mxu0 %v257
        %583 = vmatprep.subr.mxu0 0.0
        %584 = vmatpush1.msra.mxu0 %v256
        %585 = vmatprep.subr.mxu0 0.0
        %586 = vmatpush1.msra.mxu0 %v255
        %587 = vmatprep.subr.mxu0 0.0
        %588 = vmatpush1.msra.mxu0 %v254
        %589 = vmatprep.subr.mxu0 0.0
        %590 = vmatpush1.msra.mxu0 %v253
        %591 = vmatprep.subr.mxu0 0.0
        %592 = vmatpush1.msra.mxu0 %v252
        %593 = vmatprep.subr.mxu0 0.0
        %594 = vmatpush1.msra.mxu0 %v251
        %595 = vmatprep.subr.mxu0 0.0
        %596 = vmatpush1.msra.mxu0 %v250
        %597 = vmatprep.subr.mxu0 0.0
        %598 = vmatpush1.msra.mxu0 %v249
        %599 = vmatprep.subr.mxu0 0.0
        %600 = vmatpush1.msra.mxu0 %v248
        %601 = vmatprep.subr.mxu0 0.0
        %602 = vmatpush1.msra.mxu0 %v247
        %603 = vmatprep.subr.mxu0 0.0
        %604 = vmatpush1.msra.mxu0 %v246
        %605 = vmatprep.subr.mxu0 0.0
        %606 = vmatpush2.msra.mxu0 0.0
        %607 = vmatprep.subr.mxu0 0.0
        %608 = vmatpush2.msra.mxu0 0.0
        %609 = vmatprep.subr.mxu0 0.0
        %610 = vmatpush2.msra.mxu0 0.0
        %611 = vmatprep.subr.mxu0 0.0
        %612 = vmatpush2.msra.mxu0 0.0
        %613 = vmatprep.subr.mxu0 0.0
        %614 = vmatpush2.msra.mxu0 0.0
        %615 = vmatprep.subr.mxu0 0.0
        %616 = vmatpush2.msra.mxu0 0.0
        %617 = vmatprep.subr.mxu0 0.0
        %618 = vmatpush2.msra.mxu0 0.0
        %619 = vmatprep.subr.mxu0 0.0
        %620 = vmatpush2.msra.mxu0 0.0
        %621 = vmatprep.subr.mxu0 0.0
        %622 = vmatpush2.msra.mxu0 0.0
        %623 = vmatprep.subr.mxu0 0.0
        %624 = vmatpush2.msra.mxu0 0.0
        %625 = vmatprep.subr.mxu0 0.0
        %626 = vmatpush2.msra.mxu0 0.0
        %627 = vmatprep.subr.mxu0 0.0
        %628 = vmatpush2.msra.mxu0 0.0
        %629 = vmatprep.subr.mxu0 0.0
        %630 = vmatpush2.msra.mxu0 0.0
        %631 = vmatprep.subr.mxu0 0.0
        %632 = vmatpush2.msra.mxu0 0.0
        %633 = vmatprep.subr.mxu0 0.0
        %634 = vmatpush2.msra.mxu0 0.0
        %635 = vmatprep.subr.mxu0 0.0
        %636 = vmatpush2.msra.mxu0 0.0
        %637 = vmatprep.mubr.f32.mxu0 0.0
        %638 = vmatmul.mubr.f32.gmra.mxu0 %v565
        %v639 = vpop.f32.mrf.mxu0
        %v640 = vadd.f32 0.0, %v639
        %v641 = vpop.f32.mrf.mxu0
        %642 = vmatprep.mubr.f32.mxu0 0.0
        %643 = vmatmul.mubr.f32.gmra.mxu0 %v566
        %v644 = vpop.f32.mrf.mxu0
        %v645 = vadd.f32 0.0, %v644
        %v646 = vpop.f32.mrf.mxu0
        %647 = vmatprep.mubr.f32.mxu0 0.0
        %648 = vmatmul.mubr.f32.gmra.mxu0 %v567
        %v649 = vpop.f32.mrf.mxu0
        %v650 = vadd.f32 0.0, %v649
        %v651 = vpop.f32.mrf.mxu0
        %652 = vmatprep.mubr.f32.mxu0 0.0
        %653 = vmatmul.mubr.f32.gmra.mxu0 %v568
        %v654 = vpop.f32.mrf.mxu0
        %v655 = vadd.f32 0.0, %v654
        %v656 = vpop.f32.mrf.mxu0
        %657 = vmatprep.mubr.f32.mxu0 0.0
        %658 = vmatmul.mubr.f32.gmra.mxu0 %v569
        %v659 = vpop.f32.mrf.mxu0
        %v660 = vadd.f32 0.0, %v659
        %v661 = vpop.f32.mrf.mxu0
        %662 = vmatprep.mubr.f32.mxu0 0.0
        %663 = vmatmul.mubr.f32.gmra.mxu0 %v570
        %v664 = vpop.f32.mrf.mxu0
        %v665 = vadd.f32 0.0, %v664
        %v666 = vpop.f32.mrf.mxu0
        %667 = vmatprep.mubr.f32.mxu0 0.0
        %668 = vmatmul.mubr.f32.gmra.mxu0 %v571
        %v669 = vpop.f32.mrf.mxu0
        %v670 = vadd.f32 0.0, %v669
        %v671 = vpop.f32.mrf.mxu0
        %672 = vmatprep.mubr.f32.mxu0 0.0
        %673 = vmatmul.mubr.f32.gmra.mxu0 %v572
        %v674 = vpop.f32.mrf.mxu0
        %v675 = vadd.f32 0.0, %v674
        %v676 = vpop.f32.mrf.mxu0
        %677 = vdwg.mxu0
        %678 = vst.msk [vmem:[%s236] sm:$0xff] %vm273, %v640
        %679 = vst.msk [vmem:[%s236 + $0x8] sm:$0xff] %vm273, %v645
        %680 = vst.msk [vmem:[%s236 + $0x10] sm:$0xff] %vm273, %v650
        %681 = vst.msk [vmem:[%s236 + $0x18] sm:$0xff] %vm273, %v655
        %682 = vst.msk [vmem:[%s236 + $0x20] sm:$0xff] %vm273, %v660
        %683 = vst.msk [vmem:[%s236 + $0x28] sm:$0xff] %vm273, %v665
        %684 = vst.msk [vmem:[%s236 + $0x30] sm:$0xff] %vm273, %v670
        %685 = vst.msk [vmem:[%s236 + $0x38] sm:$0xff] %vm273, %v675
        %v686 = vsub.f32 %v640, %v238
        %v687 = vsub.f32 %v645, %v239
        %v688 = vsub.f32 %v650, %v240
        %v689 = vsub.f32 %v655, %v241
        %v690 = vsub.f32 %v660, %v242
        %v691 = vsub.f32 %v665, %v243
        %v692 = vsub.f32 %v670, %v244
        %v693 = vsub.f32 %v675, %v245
        %v694 = vmul.f32 %v686, %v686
        %v695 = vmul.f32 %v687, %v687
        %v696 = vmul.f32 %v688, %v688
        %v697 = vmul.f32 %v689, %v689
        %v698 = vmul.f32 %v690, %v690
        %v699 = vmul.f32 %v691, %v691
        %v700 = vmul.f32 %v692, %v692
        %v701 = vmul.f32 %v693, %v693
        %v702 = vsel %vm273, %v694, 0.0
        %v703 = vsel %vm273, %v695, 0.0
        %v704 = vadd.f32 %v702, %v703
        %v705 = vsel %vm273, %v696, 0.0
        %v706 = vadd.f32 %v704, %v705
        %v707 = vsel %vm273, %v697, 0.0
        %v708 = vadd.f32 %v706, %v707
        %v709 = vsel %vm273, %v698, 0.0
        %v710 = vadd.f32 %v708, %v709
        %v711 = vsel %vm273, %v699, 0.0
        %v712 = vadd.f32 %v710, %v711
        %v713 = vsel %vm273, %v700, 0.0
        %v714 = vadd.f32 %v712, %v713
        %v715 = vsel %vm273, %v701, 0.0
        %v716 = vadd.f32 %v714, %v715
        %717 = vadd.xlane.f32.xlu0 %v716
        %v718 = vpop.xlane.xlu0 %717
        %v719 = vrot.slane %v718, 4
        %v720 = vadd.f32 %v718, %v719
        %v721 = vrot.slane %v720, 2
        %v722 = vadd.f32 %v720, %v721
        %v723 = vrot.slane %v722, 1
        %v724 = vadd.f32 %v722, %v723
        %s725 = vtos %v724
        %v726 = vstv %s725
        %727 = vst [vmem:[%s225] sm:$0x1] %v726
        %s728 = smul.u32 8, %s20
        %p729 = scmp.lt.s32.totalorder %s728, 15
        %s730 = scalar_select %p729, %s728, 15
        %s731 = smul.addr %s730, 8
        %s732 = scalar_lea.vmem %s4, %s731
        %s733 = sand.u32 %s143, 1
        %s734 = scalar_lea.sflag [#allocation3], %s733
        %s735 = sand.u32 %s143, 1
        %s736 = scalar_lea.vmem [#allocation2], %s735
        // Predicated region
        $region37: #{tpu_custom_call.1} parent=35 // pred_check
          %p737 = pneg %p127
        $region38: #{tpu_custom_call.1} parent=35 // pred_check_branch
          %739 = sbr.rel (%p737) target = $region40
        $region39: #{tpu_custom_call.1} parent=35 // pred_region
          %s740 = smul.u32 8, %s20
        $region40: #{tpu_custom_call.1} parent=35 // pred_fallthru
          _
        // Predicated region
        $region41: #{tpu_custom_call.1} parent=35 // pred_check
          %p741 = pneg %p153
        $region42: #{tpu_custom_call.1} parent=35 // pred_check_branch
          %743 = sbr.rel (%p741) target = $region44
        $region43: #{tpu_custom_call.1} parent=35 // pred_region
          %s745 = ssub.s32 16, 16
          %746 = vsyncadd %s734, %s745
          %s747 = smul.addr %s20, 16
          %s748 = scalar_lea.hbm %s5, %s747
          %s750 = sshll.u32 %s736, 4
          %s751 = int_to_ptr.vmem [resolvable:$true] %s750
          %753 = dma.vmem_to_hbm [thread:$0]  %s751, 16, %s748, %s734
        $region44: #{tpu_custom_call.1} parent=35 // pred_fallthru
          _
      $region36: #{tpu_custom_call.1} parent=5 // pred_fallthru
        _
      %p754 = scmp.le.s32.totalorder 2, %s15
      // Predicated region
      $region45: #{tpu_custom_call.1} parent=5 // pred_check
        %p755 = pneg %p754
      $region46: #{tpu_custom_call.1} parent=5 // pred_check_branch
        %757 = sbr.rel (%p755) target = $region48
      $region47: #{tpu_custom_call.1} parent=5 // pred_region
        %s758 = ssub.s32 %s15, 2
        // Predicated region
        $region49: #{tpu_custom_call.1} parent=47 // pred_check
          %p759 = pneg %p133
        $region50: #{tpu_custom_call.1} parent=47 // pred_check_branch
          %761 = sbr.rel (%p759) target = $region52
        $region51: #{tpu_custom_call.1} parent=47 // pred_region
          %s762 = smul.u32 8, %s21
          %p763 = scmp.lt.s32.totalorder %s762, 15
          %s764 = scalar_select %p763, %s762, 15
          %s765 = smul.addr %s764, 8
          %s766 = scalar_lea.vmem %s4, %s765
        $region52: #{tpu_custom_call.1} parent=47 // pred_fallthru
          _
        // Predicated region
        $region53: #{tpu_custom_call.1} parent=47 // pred_check
          %p767 = pneg %p159
        $region54: #{tpu_custom_call.1} parent=47 // pred_check_branch
          %769 = sbr.rel (%p767) target = $region56
        $region55: #{tpu_custom_call.1} parent=47 // pred_region
          %s770 = sand.u32 %s144, 1
          %s771 = scalar_lea.sflag [#allocation3], %s770
          %s772 = sand.u32 %s144, 1
          %s773 = scalar_lea.vmem [#allocation2], %s772
          %774 = dma.done %s771, 16
        $region56: #{tpu_custom_call.1} parent=47 // pred_fallthru
          _
      $region48: #{tpu_custom_call.1} parent=5 // pred_fallthru
        _
    $region6: #{tpu_custom_call.1} parent=1 // loop_footer
      %s19 = sadd.s32 1, %s15
    $region7: #{tpu_custom_call.1} parent=1 // loop_footer_branch
      %14 = sbr.rel target = $region3
    $region8: #{tpu_custom_call.1} parent=1 // loop_exit
      _
    %775 = vsyncpa [#allocation3], 1
    %s776 = scalar_lea.sflag [#allocation3], 1
    %777 = vsyncpa %s776, 1

// kernel: tpu_custom_call.1
$region0: #{tpu_custom_call.1}
  #allocation0 [shape = 'u32[]', space=smem, size = 0x4, offset = 0x4, fixed_abs, tag = 'smem constant byte address 0x4 - core index']
  #allocation1 [shape = 'u32[144,128]{1,0:T(1,128)}', space=vmem, size = 0x12000, scoped, tag = 'internal scratch']
  %s0 = inlined_call_operand.vmem [shape: f32[128,32], index: 0, kind: input, shape index: {}]
  %s1 = inlined_call_operand.vmem [shape: f32[1,128], index: 1, kind: input, shape index: {}]
  %s2 = inlined_call_operand.vmem [shape: f32[32,128], index: 2, kind: input, shape index: {}]
  %s3 = inlined_call_operand.vmem [shape: f32[128,32], index: 3, kind: input, shape index: {}]
  %s4 = inlined_call_operand.vmem [shape: f32[128,32], index: 4, kind: output, shape index: {0}]
  %s5 = inlined_call_operand.hbm [shape: f32[2,1,128], index: 5, kind: output, shape index: {1}]
  %6 = xla_tuple %s4, %s5
  %s7 = sld [smem:[#allocation0]]
  $region57: #{tpu_custom_call.1} parent=0
    _
  %s9 = ssub.s32 1, %s7
  %s10 = scalar_select 0, %s9, %s7
  $region1: #{tpu_custom_call.1} parent=0
    #allocation2 [shape = 'u8[1024]{0}', space=vmem, size = 0x400, scoped, tag = 'output window, operand 1']
    #allocation3 [shape = 's32[2]{0}', space=sflag, size = 0x8, scoped, tag = 'scoped memory for tpu_custom_call.1']
    %11 = vsyncpa [#allocation3], 0
    %s12 = scalar_lea.sflag [#allocation3], 1
    %13 = vsyncpa %s12, 0
    loop: start=0, step=1, limit=4
    $region2: #{tpu_custom_call.1} parent=1 // loop_pre_header
      _
    $region3: #{tpu_custom_call.1} parent=1 // loop_header
      %s15 = sphi 0, %s19
      %p16 = scmp.ge.s32.totalorder %s15, 4
      %s25 = sphi 0, %s27
      %s28 = sphi 0, %s25
      %s29 = sphi 0, %s28
      %s45 = sphi 0, %s29
      %s49 = sphi 0, %s49
      %s51 = sphi 0, %s49
      %s52 = sphi 0, %s51
      %s66 = sphi 0, %s52
      %s70 = sphi 0, %s70
      %s72 = sphi 0, %s70
      %s73 = sphi 0, %s72
      %s87 = sphi 0, %s73
      %s91 = sphi 0, %s91
      %s93 = sphi 0, %s91
      %s94 = sphi 0, %s93
      %s108 = sphi 0, %s94
      %s114 = sphi 0, %s116
      %s117 = sphi 0, %s114
      %s118 = sphi 0, %s117
      %s134 = sphi 0, %s118
      %s140 = sphi 0, %s142
      %s143 = sphi 0, %s140
      %s144 = sphi 0, %s143
      %s160 = sphi 0, %s144
    $region4: #{tpu_custom_call.1} parent=1 // loop_header_branch
      %18 = sbr.rel (%p16) target = $region8
    $region5: #{tpu_custom_call.1} parent=1 // loop_body
      %s20 = ssub.s32 %s15, 1
      %s21 = ssub.s32 %s15, 2
      %s22 = sadd.s32 %s15, 1
      %s23 = ssub.s32 %s15, %s22
      %p24 = scmp.eq.s32.totalorder %s23, 0
      %s26 = sadd.s32 %s25, 1
      %s27 = scalar_select %p24, %s25, %s26
      %p30 = pneg %p24
      %p31 = scmp.eq.s32.totalorder %s15, 1
      %p32 = por %p30, %p31
      %p33 = scmp.ne.s32.totalorder %s25, %s28
      %p34 = scmp.eq.s32.totalorder %s15, 0
      %p35 = por %p33, %p34
      %p36 = scmp.ne.s32.totalorder %s25, %s28
      %p37 = scmp.eq.s32.totalorder %s20, 1
      %p38 = por %p36, %p37
      %p39 = scmp.ne.s32.totalorder %s28, %s29
      %p40 = scmp.eq.s32.totalorder %s20, 0
      %p41 = por %p39, %p40
      %p42 = scmp.ne.s32.totalorder %s28, %s29
      %p43 = scmp.eq.s32.totalorder %s21, 1
      %p44 = por %p42, %p43
      %p46 = scmp.ne.s32.totalorder %s29, %s45
      %p47 = scmp.eq.s32.totalorder %s21, 0
      %p48 = por %p46, %p47
      %s50 = sadd.s32 %s49, 1
      %p53 = scmp.eq.s32.totalorder %s15, 1
      %p54 = scmp.ne.s32.totalorder %s49, %s51
      %p55 = scmp.eq.s32.totalorder %s15, 0
      %p56 = por %p54, %p55
      %p57 = scmp.ne.s32.totalorder %s49, %s51
      %p58 = scmp.eq.s32.totalorder %s20, 1
      %p59 = por %p57, %p58
      %p60 = scmp.ne.s32.totalorder %s51, %s52
      %p61 = scmp.eq.s32.totalorder %s20, 0
      %p62 = por %p60, %p61
      %p63 = scmp.ne.s32.totalorder %s51, %s52
      %p64 = scmp.eq.s32.totalorder %s21, 1
      %p65 = por %p63, %p64
      %p67 = scmp.ne.s32.totalorder %s52, %s66
      %p68 = scmp.eq.s32.totalorder %s21, 0
      %p69 = por %p67, %p68
      %s71 = sadd.s32 %s70, 1
      %p74 = scmp.eq.s32.totalorder %s15, 1
      %p75 = scmp.ne.s32.totalorder %s70, %s72
      %p76 = scmp.eq.s32.totalorder %s15, 0
      %p77 = por %p75, %p76
      %p78 = scmp.ne.s32.totalorder %s70, %s72
      %p79 = scmp.eq.s32.totalorder %s20, 1
      %p80 = por %p78, %p79
      %p81 = scmp.ne.s32.totalorder %s72, %s73
      %p82 = scmp.eq.s32.totalorder %s20, 0
      %p83 = por %p81, %p82
      %p84 = scmp.ne.s32.totalorder %s72, %s73
      %p85 = scmp.eq.s32.totalorder %s21, 1
      %p86 = por %p84, %p85
      %p88 = scmp.ne.s32.totalorder %s73, %s87
      %p89 = scmp.eq.s32.totalorder %s21, 0
      %p90 = por %p88, %p89
      %s92 = sadd.s32 %s91, 1
      %p95 = scmp.eq.s32.totalorder %s15, 1
      %p96 = scmp.ne.s32.totalorder %s91, %s93
      %p97 = scmp.eq.s32.totalorder %s15, 0
      %p98 = por %p96, %p97
      %p99 = scmp.ne.s32.totalorder %s91, %s93
      %p100 = scmp.eq.s32.totalorder %s20, 1
      %p101 = por %p99, %p100
      %p102 = scmp.ne.s32.totalorder %s93, %s94
      %p103 = scmp.eq.s32.totalorder %s20, 0
      %p104 = por %p102, %p103
      %p105 = scmp.ne.s32.totalorder %s93, %s94
      %p106 = scmp.eq.s32.totalorder %s21, 1
      %p107 = por %p105, %p106
      %p109 = scmp.ne.s32.totalorder %s94, %s108
      %p110 = scmp.eq.s32.totalorder %s21, 0
      %p111 = por %p109, %p110
      %s112 = ssub.s32 %s15, %s22
      %p113 = scmp.eq.s32.totalorder %s112, 0
      %s115 = sadd.s32 %s114, 1
      %s116 = scalar_select %p113, %s114, %s115
      %p119 = pneg %p113
      %p120 = scmp.eq.s32.totalorder %s15, 1
      %p121 = por %p119, %p120
      %p122 = scmp.ne.s32.totalorder %s114, %s117
      %p123 = scmp.eq.s32.totalorder %s15, 0
      %p124 = por %p122, %p123
      %p125 = scmp.ne.s32.totalorder %s114, %s117
      %p126 = scmp.eq.s32.totalorder %s20, 1
      %p127 = por %p125, %p126
      %p128 = scmp.ne.s32.totalorder %s117, %s118
      %p129 = scmp.eq.s32.totalorder %s20, 0
      %p130 = por %p128, %p129
      %p131 = scmp.ne.s32.totalorder %s117, %s118
      %p132 = scmp.eq.s32.totalorder %s21, 1
      %p133 = por %p131, %p132
      %p135 = scmp.ne.s32.totalorder %s118, %s134
      %p136 = scmp.eq.s32.totalorder %s21, 0
      %p137 = por %p135, %p136
      %s138 = ssub.s32 %s15, %s22
      %p139 = scmp.eq.s32.totalorder %s138, 0
      %s141 = sadd.s32 %s140, 1
      %s142 = scalar_select %p139, %s140, %s141
      %p145 = pneg %p139
      %p146 = scmp.eq.s32.totalorder %s15, 1
      %p147 = por %p145, %p146
      %p148 = scmp.ne.s32.totalorder %s140, %s143
      %p149 = scmp.eq.s32.totalorder %s15, 0
      %p150 = por %p148, %p149
      %p151 = scmp.ne.s32.totalorder %s140, %s143
      %p152 = scmp.eq.s32.totalorder %s20, 1
      %p153 = por %p151, %p152
      %p154 = scmp.ne.s32.totalorder %s143, %s144
      %p155 = scmp.eq.s32.totalorder %s20, 0
      %p156 = por %p154, %p155
      %p157 = scmp.ne.s32.totalorder %s143, %s144
      %p158 = scmp.eq.s32.totalorder %s21, 1
      %p159 = por %p157, %p158
      %p161 = scmp.ne.s32.totalorder %s144, %s160
      %p162 = scmp.eq.s32.totalorder %s21, 0
      %p163 = por %p161, %p162
      %p164 = scmp.le.s32.totalorder 1, %s15
      %p165 = scmp.lt.s32.totalorder %s15, 3
      %p166 = pnand %p164, %p165
      %p167 = pneg %p166
      // Predicated region
      $region9: #{tpu_custom_call.1} parent=5 // pred_check
        _
      $region10: #{tpu_custom_call.1} parent=5 // pred_check_branch
        %169 = sbr.rel (%p166) target = $region12
      $region11: #{tpu_custom_call.1} parent=5 // pred_region
        %s170 = ssub.s32 %s15, 1
        // Predicated region
        $region13: #{tpu_custom_call.1} parent=11 // pred_check
          %p171 = pneg %p62
        $region14: #{tpu_custom_call.1} parent=11 // pred_check_branch
          %173 = sbr.rel (%p171) target = $region16
        $region15: #{tpu_custom_call.1} parent=11 // pred_region
          _
        $region16: #{tpu_custom_call.1} parent=11 // pred_fallthru
          _
        // Predicated region
        $region17: #{tpu_custom_call.1} parent=11 // pred_check
          %p174 = pneg %p83
        $region18: #{tpu_custom_call.1} parent=11 // pred_check_branch
          %176 = sbr.rel (%p174) target = $region20
        $region19: #{tpu_custom_call.1} parent=11 // pred_region
          _
        $region20: #{tpu_custom_call.1} parent=11 // pred_fallthru
          _
        // Predicated region
        $region21: #{tpu_custom_call.1} parent=11 // pred_check
          %p177 = pneg %p104
        $region22: #{tpu_custom_call.1} parent=11 // pred_check_branch
          %179 = sbr.rel (%p177) target = $region24
        $region23: #{tpu_custom_call.1} parent=11 // pred_region
          _
        $region24: #{tpu_custom_call.1} parent=11 // pred_fallthru
          _
      $region12: #{tpu_custom_call.1} parent=5 // pred_fallthru
        _
      %p180 = scmp.lt.s32.totalorder %s15, 2
      // Predicated region
      $region25: #{tpu_custom_call.1} parent=5 // pred_check
        %p181 = pneg %p180
      $region26: #{tpu_custom_call.1} parent=5 // pred_check_branch
        %183 = sbr.rel (%p181) target = $region28
      $region27: #{tpu_custom_call.1} parent=5 // pred_region
        // Predicated region
        $region29: #{tpu_custom_call.1} parent=27 // pred_check
          %p184 = pneg %p35
        $region30: #{tpu_custom_call.1} parent=27 // pred_check_branch
          %186 = sbr.rel (%p184) target = $region32
        $region31: #{tpu_custom_call.1} parent=27 // pred_region
          %s187 = smul.u32 8, %s15
          %p188 = scmp.lt.s32.totalorder %s187, 15
          %s189 = scalar_select %p188, %s187, 15
          %s190 = smul.addr %s189, 8
          %s191 = scalar_lea.vmem %s0, %s190
          %s192 = smul.u32 8, %s15
        $region32: #{tpu_custom_call.1} parent=27 // pred_fallthru
          _
      $region28: #{tpu_custom_call.1} parent=5 // pred_fallthru
        _
      %p193 = scmp.le.s32.totalorder 1, %s15
      %p194 = scmp.lt.s32.totalorder %s15, 3
      %p195 = pnand %p193, %p194
      %p196 = pneg %p195
      // Predicated region
      $region33: #{tpu_custom_call.1} parent=5 // pred_check
        _
      $region34: #{tpu_custom_call.1} parent=5 // pred_check_branch
        %198 = sbr.rel (%p195) target = $region36
      $region35: #{tpu_custom_call.1} parent=5 // pred_region
        %s199 = ssub.s32 %s15, 1
        %s200 = smul.u32 8, %s20
        %p201 = scmp.lt.s32.totalorder %s200, 15
        %s202 = scalar_select %p201, %s200, 15
        %s203 = smul.addr %s202, 8
        %s204 = scalar_lea.vmem %s0, %s203
        %p205 = pneg %p41
        %p206 = pneg %p38
        %p207 = pneg %p62
        %p208 = pneg %p59
        %p209 = pneg %p83
        %p210 = pneg %p80
        %p211 = pneg %p104
        %p212 = pneg %p101
        %p213 = pneg %p130
        %p214 = pneg %p127
        %s215 = smul.u32 8, %s20
        %p216 = scmp.lt.s32.totalorder %s215, 15
        %s217 = scalar_select %p216, %s215, 15
        %s218 = smul.addr %s217, 8
        %s219 = scalar_lea.vmem %s4, %s218
        %p220 = pneg %p156
        %p221 = pneg %p153
        %s222 = sand.u32 %s143, 1
        %s223 = scalar_lea.sflag [#allocation3], %s222
        %s224 = sand.u32 %s143, 1
        %s225 = scalar_lea.vmem [#allocation2], %s224
        %s226 = smul.u32 8, %s20
        %p227 = scmp.lt.s32.totalorder %s226, 15
        %s228 = scalar_select %p227, %s226, 15
        %s229 = smul.addr %s228, 8
        %s230 = scalar_lea.vmem %s0, %s229
        %s231 = smul.u32 8, %s20
        %s232 = smul.u32 8, %s20
        %p233 = scmp.lt.s32.totalorder %s232, 15
        %s234 = scalar_select %p233, %s232, 15
        %s235 = smul.addr %s234, 8
        %s236 = scalar_lea.vmem %s4, %s235
        %s237 = smul.u32 8, %s20
        %v238 = vld [vmem:[%s230] sm:$0xff]
        %v239 = vld [vmem:[%s230 + $0x8] sm:$0xff]
        %v240 = vld [vmem:[%s230 + $0x10] sm:$0xff]
        %v241 = vld [vmem:[%s230 + $0x18] sm:$0xff]
        %v242 = vld [vmem:[%s230 + $0x20] sm:$0xff]
        %v243 = vld [vmem:[%s230 + $0x28] sm:$0xff]
        %v244 = vld [vmem:[%s230 + $0x30] sm:$0xff]
        %v245 = vld [vmem:[%s230 + $0x38] sm:$0xff]
        %v246 = vld [vmem:[%s3] sm:$0xff]
        %v247 = vld [vmem:[%s3 + $0x8] sm:$0xff]
        %v248 = vld [vmem:[%s3 + $0x10] sm:$0xff]
        %v249 = vld [vmem:[%s3 + $0x18] sm:$0xff]
        %v250 = vld [vmem:[%s3 + $0x20] sm:$0xff]
        %v251 = vld [vmem:[%s3 + $0x28] sm:$0xff]
        %v252 = vld [vmem:[%s3 + $0x30] sm:$0xff]
        %v253 = vld [vmem:[%s3 + $0x38] sm:$0xff]
        %v254 = vld [vmem:[%s3 + $0x40] sm:$0xff]
        %v255 = vld [vmem:[%s3 + $0x48] sm:$0xff]
        %v256 = vld [vmem:[%s3 + $0x50] sm:$0xff]
        %v257 = vld [vmem:[%s3 + $0x58] sm:$0xff]
        %v258 = vld [vmem:[%s3 + $0x60] sm:$0xff]
        %v259 = vld [vmem:[%s3 + $0x68] sm:$0xff]
        %v260 = vld [vmem:[%s3 + $0x70] sm:$0xff]
        %v261 = vld [vmem:[%s3 + $0x78] sm:$0xff]
        %v262 = vld [vmem:[%s2] sm:$0xff]
        %v263 = vld [vmem:[%s2 + $0x8] sm:$0xff]
        %v264 = vld [vmem:[%s2 + $0x10] sm:$0xff]
        %v265 = vld [vmem:[%s2 + $0x18] sm:$0xff]
        %v266 = vld [vmem:[%s1] sm:$0x1]
        %v268 = vlaneseq
        %v269 = vshrl.u32 %v268, 7
        %v270 = vsub.s32 0, %v269
        %v271 = vrot.slane %v266, %v270
        %vm273 = vcmask 261120
        %v275 = vsel %vm273, %v238, 0
        %v278 = vsel %vm273, %v239, 0
        %v281 = vsel %vm273, %v240, 0
        %v284 = vsel %vm273, %v241, 0
        %v287 = vsel %vm273, %v242, 0
        %v290 = vsel %vm273, %v243, 0
        %v293 = vsel %vm273, %v244, 0
        %v296 = vsel %vm273, %v245, 0
        %298 = vmatprep.subr.mxu0 0.0
        %299 = vmatpush1.msra.mxu0 0.0
        %300 = vmatprep.subr.mxu0 0.0
        %301 = vmatpush1.msra.mxu0 0.0
        %302 = vmatprep.subr.mxu0 0.0
        %303 = vmatpush1.msra.mxu0 0.0
        %304 = vmatprep.subr.mxu0 0.0
        %305 = vmatpush1.msra.mxu0 0.0
        %306 = vmatprep.subr.mxu0 0.0
        %307 = vmatpush1.msra.mxu0 0.0
        %308 = vmatprep.subr.mxu0 0.0
        %309 = vmatpush1.msra.mxu0 0.0
        %310 = vmatprep.subr.mxu0 0.0
        %311 = vmatpush1.msra.mxu0 0.0
        %312 = vmatprep.subr.mxu0 0.0
        %313 = vmatpush1.msra.mxu0 0.0
        %314 = vmatprep.subr.mxu0 0.0
        %315 = vmatpush1.msra.mxu0 0.0
        %316 = vmatprep.subr.mxu0 0.0
        %317 = vmatpush1.msra.mxu0 0.0
        %318 = vmatprep.subr.mxu0 0.0
        %319 = vmatpush1.msra.mxu0 0.0
        %320 = vmatprep.subr.mxu0 0.0
        %321 = vmatpush1.msra.mxu0 0.0
        %322 = vmatprep.subr.mxu0 0.0
        %323 = vmatpush1.msra.mxu0 %v265
        %324 = vmatprep.subr.mxu0 0.0
        %325 = vmatpush1.msra.mxu0 %v264
        %326 = vmatprep.subr.mxu0 0.0
        %327 = vmatpush1.msra.mxu0 %v263
        %328 = vmatprep.subr.mxu0 0.0
        %329 = vmatpush1.msra.mxu0 %v262
        %330 = vmatprep.subr.mxu0 0.0
        %331 = vmatpush2.msra.mxu0 0.0
        %332 = vmatprep.subr.mxu0 0.0
        %333 = vmatpush2.msra.mxu0 0.0
        %334 = vmatprep.subr.mxu0 0.0
        %335 = vmatpush2.msra.mxu0 0.0
        %336 = vmatprep.subr.mxu0 0.0
        %337 = vmatpush2.msra.mxu0 0.0
        %338 = vmatprep.subr.mxu0 0.0
        %339 = vmatpush2.msra.mxu0 0.0
        %340 = vmatprep.subr.mxu0 0.0
        %341 = vmatpush2.msra.mxu0 0.0
        %342 = vmatprep.subr.mxu0 0.0
        %343 = vmatpush2.msra.mxu0 0.0
        %344 = vmatprep.subr.mxu0 0.0
        %345 = vmatpush2.msra.mxu0 0.0
        %346 = vmatprep.subr.mxu0 0.0
        %347 = vmatpush2.msra.mxu0 0.0
        %348 = vmatprep.subr.mxu0 0.0
        %349 = vmatpush2.msra.mxu0 0.0
        %350 = vmatprep.subr.mxu0 0.0
        %351 = vmatpush2.msra.mxu0 0.0
        %352 = vmatprep.subr.mxu0 0.0
        %353 = vmatpush2.msra.mxu0 0.0
        %354 = vmatprep.subr.mxu0 0.0
        %355 = vmatpush2.msra.mxu0 0.0
        %356 = vmatprep.subr.mxu0 0.0
        %357 = vmatpush2.msra.mxu0 0.0
        %358 = vmatprep.subr.mxu0 0.0
        %359 = vmatpush2.msra.mxu0 0.0
        %360 = vmatprep.subr.mxu0 0.0
        %361 = vmatpush2.msra.mxu0 0.0
        %362 = vmatprep.mubr.f32.mxu0 0.0
        %363 = vmatmul.mubr.f32.gmra.mxu0 %v275
        %v364 = vpop.f32.mrf.mxu0
        %v365 = vadd.f32 %v271, %v364
        %v366 = vpop.f32.mrf.mxu0
        %367 = vmatprep.mubr.f32.mxu0 0.0
        %368 = vmatmul.mubr.f32.gmra.mxu0 %v278
        %v369 = vpop.f32.mrf.mxu0
        %v370 = vadd.f32 %v271, %v369
        %v371 = vpop.f32.mrf.mxu0
        %372 = vmatprep.mubr.f32.mxu0 0.0
        %373 = vmatmul.mubr.f32.gmra.mxu0 %v281
        %v374 = vpop.f32.mrf.mxu0
        %v375 = vadd.f32 %v271, %v374
        %v376 = vpop.f32.mrf.mxu0
        %377 = vmatprep.mubr.f32.mxu0 0.0
        %378 = vmatmul.mubr.f32.gmra.mxu0 %v284
        %v379 = vpop.f32.mrf.mxu0
        %v380 = vadd.f32 %v271, %v379
        %v381 = vpop.f32.mrf.mxu0
        %382 = vmatprep.mubr.f32.mxu0 0.0
        %383 = vmatmul.mubr.f32.gmra.mxu0 %v287
        %v384 = vpop.f32.mrf.mxu0
        %v385 = vadd.f32 %v271, %v384
        %v386 = vpop.f32.mrf.mxu0
        %387 = vmatprep.mubr.f32.mxu0 0.0
        %388 = vmatmul.mubr.f32.gmra.mxu0 %v290
        %v389 = vpop.f32.mrf.mxu0
        %v390 = vadd.f32 %v271, %v389
        %v391 = vpop.f32.mrf.mxu0
        %392 = vmatprep.mubr.f32.mxu0 0.0
        %393 = vmatmul.mubr.f32.gmra.mxu0 %v293
        %v394 = vpop.f32.mrf.mxu0
        %v395 = vadd.f32 %v271, %v394
        %v396 = vpop.f32.mrf.mxu0
        %397 = vmatprep.mubr.f32.mxu0 0.0
        %398 = vmatmul.mubr.f32.gmra.mxu0 %v296
        %v399 = vpop.f32.mrf.mxu0
        %v400 = vadd.f32 %v271, %v399
        %v401 = vpop.f32.mrf.mxu0
        %402 = vdwg.mxu0
        %403 = vmin.xlane.f32.xlu0 %v365
        %v404 = vpop.xlane.xlu0 %403
        %405 = vmin.xlane.f32.xlu0 %v370
        %v406 = vpop.xlane.xlu0 %405
        %407 = vmin.xlane.f32.xlu0 %v375
        %v408 = vpop.xlane.xlu0 %407
        %409 = vmin.xlane.f32.xlu0 %v380
        %v410 = vpop.xlane.xlu0 %409
        %411 = vmin.xlane.f32.xlu0 %v385
        %v412 = vpop.xlane.xlu0 %411
        %413 = vmin.xlane.f32.xlu0 %v390
        %v414 = vpop.xlane.xlu0 %413
        %415 = vmin.xlane.f32.xlu0 %v395
        %v416 = vpop.xlane.xlu0 %415
        %417 = vmin.xlane.f32.xlu0 %v400
        %v418 = vpop.xlane.xlu0 %417
        %v419 = vlaneseq
        %v420 = vand.u32 %v419, 127
        %vm421 = vcmp.eq.f32.partialorder %v365, %v404
        %vm422 = vcmp.eq.f32.partialorder %v370, %v406
        %vm423 = vcmp.eq.f32.partialorder %v375, %v408
        %vm424 = vcmp.eq.f32.partialorder %v380, %v410
        %vm425 = vcmp.eq.f32.partialorder %v385, %v412
        %vm426 = vcmp.eq.f32.partialorder %v390, %v414
        %vm427 = vcmp.eq.f32.partialorder %v395, %v416
        %vm428 = vcmp.eq.f32.partialorder %v400, %v418
        %v429 = vsel %vm421, %v420, 128
        %v430 = vsel %vm422, %v420, 128
        %v431 = vsel %vm423, %v420, 128
        %v432 = vsel %vm424, %v420, 128
        %v433 = vsel %vm425, %v420, 128
        %v434 = vsel %vm426, %v420, 128
        %v435 = vsel %vm427, %v420, 128
        %v436 = vsel %vm428, %v420, 128
        %v437 = vand.u32 %v429, 65535
        %v438 = vshra.s32 %v429, 16
        %v439 = vcvt.s32.f32 %v437
        %v440 = vcvt.s32.f32 %v438
        %441 = vmin.xlane.f32.xlu0 %v440
        %v442 = vpop.xlane.xlu0 %441
        %vm443 = vcmp.eq.f32.partialorder %v440, %v442
        %v444 = vsel %vm443, %v439, inf
        %445 = vmin.xlane.f32.xlu0 %v444
        %v446 = vpop.xlane.xlu0 %445
        %v447 = vcvt.f32.s32 %v446
        %v448 = vcvt.f32.s32 %v442
        %v449 = vshll.u32 %v448, 16
        %v450 = vadd.s32 %v449, %v447
        %v451 = vand.u32 %v430, 65535
        %v452 = vshra.s32 %v430, 16
        %v453 = vcvt.s32.f32 %v451
        %v454 = vcvt.s32.f32 %v452
        %455 = vmin.xlane.f32.xlu0 %v454
        %v456 = vpop.xlane.xlu0 %455
        %vm457 = vcmp.eq.f32.partialorder %v454, %v456
        %v458 = vsel %vm457, %v453, inf
        %459 = vmin.xlane.f32.xlu0 %v458
        %v460 = vpop.xlane.xlu0 %459
        %v461 = vcvt.f32.s32 %v460
        %v462 = vcvt.f32.s32 %v456
        %v463 = vshll.u32 %v462, 16
        %v464 = vadd.s32 %v463, %v461
        %v465 = vand.u32 %v431, 65535
        %v466 = vshra.s32 %v431, 16
        %v467 = vcvt.s32.f32 %v465
        %v468 = vcvt.s32.f32 %v466
        %469 = vmin.xlane.f32.xlu0 %v468
        %v470 = vpop.xlane.xlu0 %469
        %vm471 = vcmp.eq.f32.partialorder %v468, %v470
        %v472 = vsel %vm471, %v467, inf
        %473 = vmin.xlane.f32.xlu0 %v472
        %v474 = vpop.xlane.xlu0 %473
        %v475 = vcvt.f32.s32 %v474
        %v476 = vcvt.f32.s32 %v470
        %v477 = vshll.u32 %v476, 16
        %v478 = vadd.s32 %v477, %v475
        %v479 = vand.u32 %v432, 65535
        %v480 = vshra.s32 %v432, 16
        %v481 = vcvt.s32.f32 %v479
        %v482 = vcvt.s32.f32 %v480
        %483 = vmin.xlane.f32.xlu0 %v482
        %v484 = vpop.xlane.xlu0 %483
        %vm485 = vcmp.eq.f32.partialorder %v482, %v484
        %v486 = vsel %vm485, %v481, inf
        %487 = vmin.xlane.f32.xlu0 %v486
        %v488 = vpop.xlane.xlu0 %487
        %v489 = vcvt.f32.s32 %v488
        %v490 = vcvt.f32.s32 %v484
        %v491 = vshll.u32 %v490, 16
        %v492 = vadd.s32 %v491, %v489
        %v493 = vand.u32 %v433, 65535
        %v494 = vshra.s32 %v433, 16
        %v495 = vcvt.s32.f32 %v493
        %v496 = vcvt.s32.f32 %v494
        %497 = vmin.xlane.f32.xlu0 %v496
        %v498 = vpop.xlane.xlu0 %497
        %vm499 = vcmp.eq.f32.partialorder %v496, %v498
        %v500 = vsel %vm499, %v495, inf
        %501 = vmin.xlane.f32.xlu0 %v500
        %v502 = vpop.xlane.xlu0 %501
        %v503 = vcvt.f32.s32 %v502
        %v504 = vcvt.f32.s32 %v498
        %v505 = vshll.u32 %v504, 16
        %v506 = vadd.s32 %v505, %v503
        %v507 = vand.u32 %v434, 65535
        %v508 = vshra.s32 %v434, 16
        %v509 = vcvt.s32.f32 %v507
        %v510 = vcvt.s32.f32 %v508
        %511 = vmin.xlane.f32.xlu0 %v510
        %v512 = vpop.xlane.xlu0 %511
        %vm513 = vcmp.eq.f32.partialorder %v510, %v512
        %v514 = vsel %vm513, %v509, inf
        %515 = vmin.xlane.f32.xlu0 %v514
        %v516 = vpop.xlane.xlu0 %515
        %v517 = vcvt.f32.s32 %v516
        %v518 = vcvt.f32.s32 %v512
        %v519 = vshll.u32 %v518, 16
        %v520 = vadd.s32 %v519, %v517
        %v521 = vand.u32 %v435, 65535
        %v522 = vshra.s32 %v435, 16
        %v523 = vcvt.s32.f32 %v521
        %v524 = vcvt.s32.f32 %v522
        %525 = vmin.xlane.f32.xlu0 %v524
        %v526 = vpop.xlane.xlu0 %525
        %vm527 = vcmp.eq.f32.partialorder %v524, %v526
        %v528 = vsel %vm527, %v523, inf
        %529 = vmin.xlane.f32.xlu0 %v528
        %v530 = vpop.xlane.xlu0 %529
        %v531 = vcvt.f32.s32 %v530
        %v532 = vcvt.f32.s32 %v526
        %v533 = vshll.u32 %v532, 16
        %v534 = vadd.s32 %v533, %v531
        %v535 = vand.u32 %v436, 65535
        %v536 = vshra.s32 %v436, 16
        %v537 = vcvt.s32.f32 %v535
        %v538 = vcvt.s32.f32 %v536
        %539 = vmin.xlane.f32.xlu0 %v538
        %v540 = vpop.xlane.xlu0 %539
        %vm541 = vcmp.eq.f32.partialorder %v538, %v540
        %v542 = vsel %vm541, %v537, inf
        %543 = vmin.xlane.f32.xlu0 %v542
        %v544 = vpop.xlane.xlu0 %543
        %v545 = vcvt.f32.s32 %v544
        %v546 = vcvt.f32.s32 %v540
        %v547 = vshll.u32 %v546, 16
        %v548 = vadd.s32 %v547, %v545
        %vm549 = vcmp.eq.s32.totalorder %v420, %v450
        %vm550 = vcmp.eq.s32.totalorder %v420, %v464
        %vm551 = vcmp.eq.s32.totalorder %v420, %v478
        %vm552 = vcmp.eq.s32.totalorder %v420, %v492
        %vm553 = vcmp.eq.s32.totalorder %v420, %v506
        %vm554 = vcmp.eq.s32.totalorder %v420, %v520
        %vm555 = vcmp.eq.s32.totalorder %v420, %v534
        %vm556 = vcmp.eq.s32.totalorder %v420, %v548
        %v557 = vsel %vm549, 1, 0
        %v558 = vsel %vm550, 1, 0
        %v559 = vsel %vm551, 1, 0
        %v560 = vsel %vm552, 1, 0
        %v561 = vsel %vm553, 1, 0
        %v562 = vsel %vm554, 1, 0
        %v563 = vsel %vm555, 1, 0
        %v564 = vsel %vm556, 1, 0
        %v565 = vcvt.s32.f32 %v557
        %v566 = vcvt.s32.f32 %v558
        %v567 = vcvt.s32.f32 %v559
        %v568 = vcvt.s32.f32 %v560
        %v569 = vcvt.s32.f32 %v561
        %v570 = vcvt.s32.f32 %v562
        %v571 = vcvt.s32.f32 %v563
        %v572 = vcvt.s32.f32 %v564
        %573 = vmatprep.subr.mxu0 0.0
        %574 = vmatpush1.msra.mxu0 %v261
        %575 = vmatprep.subr.mxu0 0.0
        %576 = vmatpush1.msra.mxu0 %v260
        %577 = vmatprep.subr.mxu0 0.0
        %578 = vmatpush1.msra.mxu0 %v259
        %579 = vmatprep.subr.mxu0 0.0
        %580 = vmatpush1.msra.mxu0 %v258
        %581 = vmatprep.subr.mxu0 0.0
        %582 = vmatpush1.msra.mxu0 %v257
        %583 = vmatprep.subr.mxu0 0.0
        %584 = vmatpush1.msra.mxu0 %v256
        %585 = vmatprep.subr.mxu0 0.0
        %586 = vmatpush1.msra.mxu0 %v255
        %587 = vmatprep.subr.mxu0 0.0
        %588 = vmatpush1.msra.mxu0 %v254
        %589 = vmatprep.subr.mxu0 0.0
        %590 = vmatpush1.msra.mxu0 %v253
        %591 = vmatprep.subr.mxu0 0.0
        %592 = vmatpush1.msra.mxu0 %v252
        %593 = vmatprep.subr.mxu0 0.0
        %594 = vmatpush1.msra.mxu0 %v251
        %595 = vmatprep.subr.mxu0 0.0
        %596 = vmatpush1.msra.mxu0 %v250
        %597 = vmatprep.subr.mxu0 0.0
        %598 = vmatpush1.msra.mxu0 %v249
        %599 = vmatprep.subr.mxu0 0.0
        %600 = vmatpush1.msra.mxu0 %v248
        %601 = vmatprep.subr.mxu0 0.0
        %602 = vmatpush1.msra.mxu0 %v247
        %603 = vmatprep.subr.mxu0 0.0
        %604 = vmatpush1.msra.mxu0 %v246
        %605 = vmatprep.subr.mxu0 0.0
        %606 = vmatpush2.msra.mxu0 0.0
        %607 = vmatprep.subr.mxu0 0.0
        %608 = vmatpush2.msra.mxu0 0.0
        %609 = vmatprep.subr.mxu0 0.0
        %610 = vmatpush2.msra.mxu0 0.0
        %611 = vmatprep.subr.mxu0 0.0
        %612 = vmatpush2.msra.mxu0 0.0
        %613 = vmatprep.subr.mxu0 0.0
        %614 = vmatpush2.msra.mxu0 0.0
        %615 = vmatprep.subr.mxu0 0.0
        %616 = vmatpush2.msra.mxu0 0.0
        %617 = vmatprep.subr.mxu0 0.0
        %618 = vmatpush2.msra.mxu0 0.0
        %619 = vmatprep.subr.mxu0 0.0
        %620 = vmatpush2.msra.mxu0 0.0
        %621 = vmatprep.subr.mxu0 0.0
        %622 = vmatpush2.msra.mxu0 0.0
        %623 = vmatprep.subr.mxu0 0.0
        %624 = vmatpush2.msra.mxu0 0.0
        %625 = vmatprep.subr.mxu0 0.0
        %626 = vmatpush2.msra.mxu0 0.0
        %627 = vmatprep.subr.mxu0 0.0
        %628 = vmatpush2.msra.mxu0 0.0
        %629 = vmatprep.subr.mxu0 0.0
        %630 = vmatpush2.msra.mxu0 0.0
        %631 = vmatprep.subr.mxu0 0.0
        %632 = vmatpush2.msra.mxu0 0.0
        %633 = vmatprep.subr.mxu0 0.0
        %634 = vmatpush2.msra.mxu0 0.0
        %635 = vmatprep.subr.mxu0 0.0
        %636 = vmatpush2.msra.mxu0 0.0
        %637 = vmatprep.mubr.f32.mxu0 0.0
        %638 = vmatmul.mubr.f32.gmra.mxu0 %v565
        %v639 = vpop.f32.mrf.mxu0
        %v640 = vadd.f32 0.0, %v639
        %v641 = vpop.f32.mrf.mxu0
        %642 = vmatprep.mubr.f32.mxu0 0.0
        %643 = vmatmul.mubr.f32.gmra.mxu0 %v566
        %v644 = vpop.f32.mrf.mxu0
        %v645 = vadd.f32 0.0, %v644
        %v646 = vpop.f32.mrf.mxu0
        %647 = vmatprep.mubr.f32.mxu0 0.0
        %648 = vmatmul.mubr.f32.gmra.mxu0 %v567
        %v649 = vpop.f32.mrf.mxu0
        %v650 = vadd.f32 0.0, %v649
        %v651 = vpop.f32.mrf.mxu0
        %652 = vmatprep.mubr.f32.mxu0 0.0
        %653 = vmatmul.mubr.f32.gmra.mxu0 %v568
        %v654 = vpop.f32.mrf.mxu0
        %v655 = vadd.f32 0.0, %v654
        %v656 = vpop.f32.mrf.mxu0
        %657 = vmatprep.mubr.f32.mxu0 0.0
        %658 = vmatmul.mubr.f32.gmra.mxu0 %v569
        %v659 = vpop.f32.mrf.mxu0
        %v660 = vadd.f32 0.0, %v659
        %v661 = vpop.f32.mrf.mxu0
        %662 = vmatprep.mubr.f32.mxu0 0.0
        %663 = vmatmul.mubr.f32.gmra.mxu0 %v570
        %v664 = vpop.f32.mrf.mxu0
        %v665 = vadd.f32 0.0, %v664
        %v666 = vpop.f32.mrf.mxu0
        %667 = vmatprep.mubr.f32.mxu0 0.0
        %668 = vmatmul.mubr.f32.gmra.mxu0 %v571
        %v669 = vpop.f32.mrf.mxu0
        %v670 = vadd.f32 0.0, %v669
        %v671 = vpop.f32.mrf.mxu0
        %672 = vmatprep.mubr.f32.mxu0 0.0
        %673 = vmatmul.mubr.f32.gmra.mxu0 %v572
        %v674 = vpop.f32.mrf.mxu0
        %v675 = vadd.f32 0.0, %v674
        %v676 = vpop.f32.mrf.mxu0
        %677 = vdwg.mxu0
        %678 = vst.msk [vmem:[%s236] sm:$0xff] %vm273, %v640
        %679 = vst.msk [vmem:[%s236 + $0x8] sm:$0xff] %vm273, %v645
        %680 = vst.msk [vmem:[%s236 + $0x10] sm:$0xff] %vm273, %v650
        %681 = vst.msk [vmem:[%s236 + $0x18] sm:$0xff] %vm273, %v655
        %682 = vst.msk [vmem:[%s236 + $0x20] sm:$0xff] %vm273, %v660
        %683 = vst.msk [vmem:[%s236 + $0x28] sm:$0xff] %vm273, %v665
        %684 = vst.msk [vmem:[%s236 + $0x30] sm:$0xff] %vm273, %v670
        %685 = vst.msk [vmem:[%s236 + $0x38] sm:$0xff] %vm273, %v675
        %v686 = vsub.f32 %v640, %v238
        %v687 = vsub.f32 %v645, %v239
        %v688 = vsub.f32 %v650, %v240
        %v689 = vsub.f32 %v655, %v241
        %v690 = vsub.f32 %v660, %v242
        %v691 = vsub.f32 %v665, %v243
        %v692 = vsub.f32 %v670, %v244
        %v693 = vsub.f32 %v675, %v245
        %v694 = vmul.f32 %v686, %v686
        %v695 = vmul.f32 %v687, %v687
        %v696 = vmul.f32 %v688, %v688
        %v697 = vmul.f32 %v689, %v689
        %v698 = vmul.f32 %v690, %v690
        %v699 = vmul.f32 %v691, %v691
        %v700 = vmul.f32 %v692, %v692
        %v701 = vmul.f32 %v693, %v693
        %v702 = vsel %vm273, %v694, 0.0
        %v703 = vsel %vm273, %v695, 0.0
        %v704 = vadd.f32 %v702, %v703
        %v705 = vsel %vm273, %v696, 0.0
        %v706 = vadd.f32 %v704, %v705
        %v707 = vsel %vm273, %v697, 0.0
        %v708 = vadd.f32 %v706, %v707
        %v709 = vsel %vm273, %v698, 0.0
        %v710 = vadd.f32 %v708, %v709
        %v711 = vsel %vm273, %v699, 0.0
        %v712 = vadd.f32 %v710, %v711
        %v713 = vsel %vm273, %v700, 0.0
        %v714 = vadd.f32 %v712, %v713
        %v715 = vsel %vm273, %v701, 0.0
        %v716 = vadd.f32 %v714, %v715
        %717 = vadd.xlane.f32.xlu0 %v716
        %v718 = vpop.xlane.xlu0 %717
        %v719 = vrot.slane %v718, 4
        %v720 = vadd.f32 %v718, %v719
        %v721 = vrot.slane %v720, 2
        %v722 = vadd.f32 %v720, %v721
        %v723 = vrot.slane %v722, 1
        %v724 = vadd.f32 %v722, %v723
        %s725 = vtos %v724
        %v726 = vstv %s725
        %727 = vst [vmem:[%s225] sm:$0x1] %v726
        %s728 = smul.u32 8, %s20
        %p729 = scmp.lt.s32.totalorder %s728, 15
        %s730 = scalar_select %p729, %s728, 15
        %s731 = smul.addr %s730, 8
        %s732 = scalar_lea.vmem %s4, %s731
        %s733 = sand.u32 %s143, 1
        %s734 = scalar_lea.sflag [#allocation3], %s733
        %s735 = sand.u32 %s143, 1
        %s736 = scalar_lea.vmem [#allocation2], %s735
        // Predicated region
        $region37: #{tpu_custom_call.1} parent=35 // pred_check
          %p737 = pneg %p127
        $region38: #{tpu_custom_call.1} parent=35 // pred_check_branch
          %739 = sbr.rel (%p737) target = $region40
        $region39: #{tpu_custom_call.1} parent=35 // pred_region
          %s740 = smul.u32 8, %s20
        $region40: #{tpu_custom_call.1} parent=35 // pred_fallthru
          _
        // Predicated region
        $region41: #{tpu_custom_call.1} parent=35 // pred_check
          %p741 = pneg %p153
        $region42: #{tpu_custom_call.1} parent=35 // pred_check_branch
          %743 = sbr.rel (%p741) target = $region44
        $region43: #{tpu_custom_call.1} parent=35 // pred_region
          %s745 = ssub.s32 16, 16
          %746 = vsyncadd %s734, %s745
          %s747 = smul.addr %s20, 16
          %s748 = scalar_lea.hbm %s5, %s747
          %s750 = sshll.u32 %s736, 4
          %s751 = int_to_ptr.vmem [resolvable:$true] %s750
          %753 = dma.vmem_to_hbm [thread:$0]  %s751, 16, %s748, %s734
        $region44: #{tpu_custom_call.1} parent=35 // pred_fallthru
          _
      $region36: #{tpu_custom_call.1} parent=5 // pred_fallthru
        _
      %p754 = scmp.le.s32.totalorder 2, %s15
      // Predicated region
      $region45: #{tpu_custom_call.1} parent=5 // pred_check
        %p755 = pneg %p754
      $region46: #{tpu_custom_call.1} parent=5 // pred_check_branch
        %757 = sbr.rel (%p755) target = $region48
      $region47: #{tpu_custom_call.1} parent=5 // pred_region
        %s758 = ssub.s32 %s15, 2
        // Predicated region
        $region49: #{tpu_custom_call.1} parent=47 // pred_check
          %p759 = pneg %p133
        $region50: #{tpu_custom_call.1} parent=47 // pred_check_branch
          %761 = sbr.rel (%p759) target = $region52
        $region51: #{tpu_custom_call.1} parent=47 // pred_region
          %s762 = smul.u32 8, %s21
          %p763 = scmp.lt.s32.totalorder %s762, 15
          %s764 = scalar_select %p763, %s762, 15
          %s765 = smul.addr %s764, 8
          %s766 = scalar_lea.vmem %s4, %s765
        $region52: #{tpu_custom_call.1} parent=47 // pred_fallthru
          _
        // Predicated region
        $region53: #{tpu_custom_call.1} parent=47 // pred_check
          %p767 = pneg %p159
        $region54: #{tpu_custom_call.1} parent=47 // pred_check_branch
          %769 = sbr.rel (%p767) target = $region56
        $region55: #{tpu_custom_call.1} parent=47 // pred_region
          %s770 = sand.u32 %s144, 1
          %s771 = scalar_lea.sflag [#allocation3], %s770
          %s772 = sand.u32 %s144, 1
          %s773 = scalar_lea.vmem [#allocation2], %s772
          %774 = dma.done %s771, 16
        $region56: #{tpu_custom_call.1} parent=47 // pred_fallthru
          _
      $region48: #{tpu_custom_call.1} parent=5 // pred_fallthru
        _
    $region6: #{tpu_custom_call.1} parent=1 // loop_footer
      %s19 = sadd.s32 1, %s15
    $region7: #{tpu_custom_call.1} parent=1 // loop_footer_branch
      %14 = sbr.rel target = $region3
    $region8: #{tpu_custom_call.1} parent=1 // loop_exit
      _
    %775 = vsyncpa [#allocation3], 1
    %s776 = scalar_lea.sflag [#allocation3], 1
    %777 = vsyncpa %s776, 1

</llo_original>
